<compile_context>
chip_gen: v7x
topology: tpu7x:2x2x1
jax: 0.10.0
libtpu: 0.0.40
codegen_flags: <defaults>
</compile_context>

<pallas_src>
import functools
import re

import jax
import jax.numpy as jnp
from jax import lax
from jax.experimental import pallas as pl
from jax.experimental.pallas import tpu as pltpu


def _round_up(x, m):
    return (x + m - 1) // m * m


def _tpu_generation():
    try:
        kind = jax.devices()[0].device_kind
    except Exception:
        return 0
    m = re.search(r"v(\d+)", kind.lower())
    return int(m.group(1)) if m else 0


def _use_bf16_activations():
    # bf16 EUP exists on v6e/v7x; v5e (and older) has no bf16 VPU/EUP path.
    return _tpu_generation() >= 6


# ----------------------------------------------------------------------------
# Fused per-(band, batch, time-tile) kernel:
#   LayerNorm -> Linear -> Tanh -> Linear(value|gate fused) -> GLU
# ----------------------------------------------------------------------------
def _norm_mlp_glu_kernel(bids_ref, q_ref, g_ref, bt_ref, w1_ref, b1_ref,
                         w2_ref, b2_ref, o_ref, *, glu_half, bf16_act):
    # q_ref:  (1,1,TT,E)        gamma/beta: (1,1,E)
    # w1:     (1,E,H)  bf16     b1:         (1,1,H)
    # w2:     (1,H,2*glu_half) bf16  (value cols | gate cols, 128-aligned split)
    # b2:     (1,1,2*glu_half)  o_ref: (1,1,TT,glu_half) f32
    x = q_ref[0, 0].astype(jnp.float32)                       # (TT, E)

    # LayerNorm over emb dim (biased variance, eps=1e-5, PyTorch default).
    mean = jnp.mean(x, axis=-1, keepdims=True)
    xc = x - mean
    var = jnp.mean(xc * xc, axis=-1, keepdims=True)
    xn = xc * lax.rsqrt(var + 1e-5)
    xn = xn * g_ref[0] + bt_ref[0]

    # hidden: Linear(E -> H) + Tanh  (bf16 MXU operands, f32 accumulation)
    h_pre = jnp.dot(xn.astype(jnp.bfloat16), w1_ref[0],
                    preferred_element_type=jnp.float32) + b1_ref[0]
    if bf16_act:                       # bf16 EUP path (v6e/v7x only)
        h = jnp.tanh(h_pre.astype(jnp.bfloat16))
    else:
        h = jnp.tanh(h_pre)

    # output: one fused Linear(H -> 2*glu_half), then GLU at the aligned split.
    o = jnp.dot(h.astype(jnp.bfloat16), w2_ref[0],
                preferred_element_type=jnp.float32) + b2_ref[0]
    a = o[:, :glu_half]
    gate = o[:, glu_half:]
    if bf16_act:
        s = jax.nn.sigmoid(gate.astype(jnp.bfloat16)).astype(jnp.float32)
    else:
        s = jax.nn.sigmoid(gate)
    o_ref[0, 0] = (a * s).astype(o_ref.dtype)


# ----------------------------------------------------------------------------
# VMEM budget / time-tile choice (per generation)
# ----------------------------------------------------------------------------
def _vmem_need_bytes(tt, E, H, outw):
    q_blk = tt * E * 4
    o_blk = tt * outw * 4
    wgt = 2 * E * 4 + E * H * 2 + H * 4 + 2 * H * outw * 2 + 2 * outw * 4
    tmp = tt * (2 * E + 2 * H + 4 * outw) * 4     # f32 intermediates (x, xn, h, o, a*s)
    return 2 * (q_blk + o_blk) + 2 * wgt + tmp    # double-buffered IO + weights + temps


def _choose_tile_t(n_time, E, H, outw, gen, tile_t_target):
    if gen >= 7:
        cap = 44 << 20          # 64 MiB/TC on v7x -> leave headroom
    elif gen >= 5:
        cap = 96 << 20          # 128 MiB on v5e/v6e
    else:
        cap = 64 << 20
    t8 = _round_up(max(n_time, 8), 8)
    n_units = t8 // 8
    best = 8
    for d in range(1, n_units + 1):               # largest divisor tile that fits
        if n_units % d:
            continue
        tt = 8 * d
        if tt > tile_t_target:
            break
        if _vmem_need_bytes(tt, E, H, outw) <= cap:
            best = tt
    return best, t8, cap


# ----------------------------------------------------------------------------
# Parameter packing: bucket bands by padded output width; split+permute GLU
# weights into lane-contiguous [re | im] halves; bf16 matmul weights.
# ----------------------------------------------------------------------------
def pack_params(params, band_specs, in_channels, complex_mask=True):
    reim = 2 if complex_mask else 1
    E = params[0]["gamma"].shape[0]
    H = params[0]["w1"].shape[1]
    bandwidths = [fe - fs for fs, fe in band_specs]
    cws = [bw * in_channels for bw in bandwidths]
    hps = [max(128, _round_up(cw, 128)) for cw in cws]

    buckets = {}
    for b, hp in enumerate(hps):
        buckets.setdefault(hp, []).append(b)

    packed_buckets = []
    for hp, band_ids in sorted(buckets.items()):
        outw = (2 * hp) if complex_mask else hp
        gam, bet, w1s, b1s, w2s, b2s = [], [], [], [], [], []
        for b in band_ids:
            p = params[b]
            cw = cws[b]
            o_half = cw * reim
            w2, b2 = p["w2"], p["b2"]
            w2v, w2g = w2[:, :o_half], w2[:, o_half:]
            b2v, b2g = b2[:o_half], b2[o_half:]
            pad = hp - cw
            if complex_mask:
                def lay_w(w, cw=cw, pad=pad):      # interleaved (re,im) -> [re|pad|im|pad]
                    w = w.reshape(H, cw, 2)
                    z = jnp.zeros((H, pad), w.dtype)
                    return jnp.concatenate([w[:, :, 0], z, w[:, :, 1], z], axis=1)
                def lay_b(v, cw=cw, pad=pad):
                    v = v.reshape(cw, 2)
                    z = jnp.zeros((pad,), v.dtype)
                    return jnp.concatenate([v[:, 0], z, v[:, 1], z], axis=0)
            else:
                def lay_w(w, pad=pad):
                    return jnp.pad(w, ((0, 0), (0, pad)))
                def lay_b(v, pad=pad):
                    return jnp.pad(v, (0, pad))
            # fused [value | gate] weight so the kernel does one MXU dot
            w2s.append(jnp.concatenate([lay_w(w2v), lay_w(w2g)], axis=1))
            b2s.append(jnp.concatenate([lay_b(b2v), lay_b(b2g)], axis=0))
            gam.append(p["gamma"]); bet.append(p["beta"])
            w1s.append(p["w1"]); b1s.append(p["b1"])
        nb = len(band_ids)
        packed_buckets.append(dict(
            band_ids=jnp.asarray(band_ids, jnp.int32),
            band_ids_py=list(band_ids),
            glu_half=outw,
            gamma=jnp.stack(gam).reshape(nb, 1, E),
            beta=jnp.stack(bet).reshape(nb, 1, E),
            w1=jnp.stack(w1s).astype(jnp.bfloat16),
            b1=jnp.stack(b1s).reshape(nb, 1, H),
            w2=jnp.stack(w2s).astype(jnp.bfloat16),
            b2=jnp.stack(b2s).reshape(nb, 1, 2 * outw),
        ))
    return dict(buckets=packed_buckets, E=E, H=H,
                bandwidths=bandwidths, complex_mask=complex_mask)


# ----------------------------------------------------------------------------
# MaskEstimationModule.forward
# ----------------------------------------------------------------------------
def mask_estimation_forward(q, packed, band_specs, in_channels, tile_t=1024):
    """q: (batch, n_bands, n_time, emb_dim) f32
       returns (batch, in_channels, sum(bandwidths), n_time) complex64 (or f32)."""
    batch, n_bands, n_time, E = q.shape
    H = packed["H"]
    complex_mask = packed["complex_mask"]
    bandwidths = packed["bandwidths"]

    gen = _tpu_generation()
    bf16_act = _use_bf16_activations()
    max_outw = max(bk["glu_half"] for bk in packed["buckets"])
    TT, T_pad, vmem_cap = _choose_tile_t(n_time, E, H, max_outw, gen, tile_t)

    # q stays in native layout; only a <=7-row (multiple-of-8) time pad if needed.
    q_in = q if T_pad == n_time else jnp.pad(
        q, ((0, 0), (0, 0), (0, T_pad - n_time), (0, 0)))

    masks = [None] * n_bands
    for bk in packed["buckets"]:
        band_ids_py = bk["band_ids_py"]
        nbk = len(band_ids_py)
        outw = bk["glu_half"]
        hp = outw // 2 if complex_mask else outw

        kernel = functools.partial(_norm_mlp_glu_kernel,
                                   glu_half=outw, bf16_act=bf16_act)

        def q_map(ib, bb, tt, bids):
            return (bb, bids[ib], tt, 0)          # band id looked up in SMEM

        def w_map(ib, bb, tt, bids):
            return (ib, 0, 0)                     # resident across batch/time tiles

        def o_map(ib, bb, tt, bids):
            return (ib, bb, tt, 0)

        slab = pl.pallas_call(
            kernel,
            out_shape=jax.ShapeDtypeStruct((nbk, batch, T_pad, outw), jnp.float32),
            grid_spec=pltpu.PrefetchScalarGridSpec(
                num_scalar_prefetch=1,
                grid=(nbk, batch, T_pad // TT),
                in_specs=[
                    pl.BlockSpec((1, 1, TT, E), q_map),        # q (native layout)
                    pl.BlockSpec((1, 1, E), w_map),            # gamma
                    pl.BlockSpec((1, 1, E), w_map),            # beta
                    pl.BlockSpec((1, E, H), w_map),            # w1
                    pl.BlockSpec((1, 1, H), w_map),            # b1
                    pl.BlockSpec((1, H, 2 * outw), w_map),     # w2 (value|gate fused)
                    pl.BlockSpec((1, 1, 2 * outw), w_map),     # b2
                ],
                out_specs=pl.BlockSpec((1, 1, TT, outw), o_map),
            ),
            compiler_params=pltpu.CompilerParams(
                dimension_semantics=("parallel", "parallel", "parallel"),
                vmem_limit_bytes=int(vmem_cap),
            ),
        )(bk["band_ids"], q_in, bk["gamma"], bk["beta"], bk["w1"], bk["b1"],
          bk["w2"], bk["b2"])

        slab = slab[:, :, :n_time, :]             # strip time padding (no-op if none)
        if complex_mask:
            # contiguous, 128-aligned re/im halves (no stride-2 deinterleave)
            slab = lax.complex(slab[..., :hp], slab[..., hp:])

        # Batched reshape/transpose glue per (bucket, bandwidth) group.
        by_bw = {}
        for local_i, bid in enumerate(band_ids_py):
            by_bw.setdefault(bandwidths[bid], []).append((local_i, bid))
        for bw, items in by_bw.items():
            cw = bw * in_channels
            idxs = [it[0] for it in items]
            if idxs == list(range(idxs[0], idxs[0] + len(idxs))):
                sub = slab[idxs[0]:idxs[0] + len(idxs)]
            else:
                sub = jnp.take(slab, jnp.asarray(idxs, jnp.int32), axis=0)
            sub = sub[..., :cw].reshape(len(items), batch, n_time, in_channels, bw)
            sub = jnp.transpose(sub, (1, 3, 0, 4, 2))   # (batch, in_c, G, bw, T)
            for j, (_, bid) in enumerate(items):
                masks[bid] = sub[:, :, j]

    return jnp.concatenate(masks, axis=2)


# ----------------------------------------------------------------------------
# Pure-JAX references (PyTorch-exact f32 math, and a precision-matched variant)
# ----------------------------------------------------------------------------
def _reference_forward(q, params, band_specs, in_channels, complex_mask=True,
                       match_kernel_precision=False, bf16_act=False):
    batch, n_bands, n_time, E = q.shape
    masks = []
    for b, (fs, fe) in enumerate(band_specs):
        bw = fe - fs
        p = params[b]
        x = q[:, b, :, :].reshape(batch * n_time, E)
        mean = jnp.mean(x, axis=-1, keepdims=True)
        xc = x - mean
        var = jnp.mean(xc * xc, axis=-1, keepdims=True)
        xn = xc * lax.rsqrt(var + 1e-5) * p["gamma"] + p["beta"]
        if match_kernel_precision:
            h_pre = jnp.dot(xn.astype(jnp.bfloat16), p["w1"].astype(jnp.bfloat16),
                            preferred_element_type=jnp.float32) + p["b1"]
            h = jnp.tanh(h_pre.astype(jnp.bfloat16)) if bf16_act else jnp.tanh(h_pre)
            o = jnp.dot(h.astype(jnp.bfloat16), p["w2"].astype(jnp.bfloat16),
                        preferred_element_type=jnp.float32) + p["b2"]
            half = o.shape[-1] // 2
            gate = o[:, half:]
            s = (jax.nn.sigmoid(gate.astype(jnp.bfloat16)).astype(jnp.float32)
                 if bf16_act else jax.nn.sigmoid(gate))
            mb = o[:, :half] * s
        else:
            h = jnp.tanh(xn @ p["w1"] + p["b1"])
            o = h @ p["w2"] + p["b2"]
            half = o.shape[-1] // 2
            mb = o[:, :half] * jax.nn.sigmoid(o[:, half:])
        if complex_mask:
            mb = mb.reshape(batch, n_time, in_channels, bw, 2)
            mb = lax.complex(mb[..., 0], mb[..., 1])
        else:
            mb = mb.reshape(batch, n_time, in_channels, bw)
        masks.append(jnp.transpose(mb, (0, 2, 3, 1)))
    return jnp.concatenate(masks, axis=2)


# ----------------------------------------------------------------------------
# Deterministic synthetic parameter init (shapes from NormMLP.__init__)
# ----------------------------------------------------------------------------
def init_params(key, band_specs, emb_dim, mlp_dim, in_channels, complex_mask=True):
    reim = 2 if complex_mask else 1
    params = []
    for b, (fstart, fend) in enumerate(band_specs):
        bw = fend - fstart
        out_dim = bw * in_channels * reim * 2      # *2 for the GLU gate half
        k = jax.random.fold_in(key, b)
        k1, k2, k3, k4 = jax.random.split(k, 4)
        params.append(dict(
            gamma=jnp.ones((emb_dim,), jnp.float32),
            beta=jnp.zeros((emb_dim,), jnp.float32),
            w1=0.1 * jax.random.normal(k1, (emb_dim, mlp_dim), jnp.float32),
            b1=0.01 * jax.random.normal(k2, (mlp_dim,), jnp.float32),
            w2=0.1 * jax.random.normal(k3, (mlp_dim, out_dim), jnp.float32),
            b2=0.01 * jax.random.normal(k4, (out_dim,), jnp.float32),
        ))
    return params


if __name__ == "__main__":
    # Small shapes consistent with the module's forward; mixed bandwidths so both
    # the bucketing and the (bucket, bandwidth) grouping paths are exercised.
    batch, n_time, emb_dim, mlp_dim, in_channels = 2, 12, 32, 32, 2
    band_specs = [(0, 4), (4, 10), (10, 16), (16, 100)]   # non-overlapping, no gaps
    n_bands = len(band_specs)

    key = jax.random.PRNGKey(0)
    kq, kp = jax.random.split(key)
    q = jax.random.normal(kq, (batch, n_bands, n_time, emb_dim), jnp.float32)
    params = init_params(kp, band_specs, emb_dim, mlp_dim, in_channels)
    packed = pack_params(params, band_specs, in_channels, complex_mask=True)

    fwd = jax.jit(lambda q_: mask_estimation_forward(q_, packed, band_specs, in_channels))
    out = jax.block_until_ready(fwd(q))

    n_freq = sum(fe - fs for fs, fe in band_specs)
    assert out.shape == (batch, in_channels, n_freq, n_time)
    assert out.dtype == jnp.complex64

    bf16_act = _use_bf16_activations()
    # Tight check against a reference mirroring the kernel's bf16 matmul/EUP casts.
    ref_matched = _reference_forward(q, params, band_specs, in_channels,
                                     match_kernel_precision=True, bf16_act=bf16_act)
    assert jnp.allclose(out, ref_matched, atol=5e-3, rtol=5e-3)

    # Looser check against exact f32 PyTorch semantics (bf16 operand rounding).
    ref_f32 = _reference_forward(q, params, band_specs, in_channels)
    assert jnp.allclose(out, ref_f32, atol=3e-2, rtol=3e-2)

    print("KERNEL_OK")
</pallas_src>

<mosaic_0001>
module attributes {stable_mosaic.version = 11 : i64} {
  func.func @_norm_mlp_glu_kernel(%arg0: i32, %arg1: i32, %arg2: i32, %arg3: memref<1xi32, #tpu.memory_space<smem>>, %arg4: memref<1x1x16x32xf32, #tpu.memory_space<vmem>>, %arg5: memref<1x1x32xf32, #tpu.memory_space<vmem>>, %arg6: memref<1x1x32xf32, #tpu.memory_space<vmem>>, %arg7: memref<1x32x32xbf16, #tpu.memory_space<vmem>>, %arg8: memref<1x1x32xf32, #tpu.memory_space<vmem>>, %arg9: memref<1x32x1024xbf16, #tpu.memory_space<vmem>>, %arg10: memref<1x1x1024xf32, #tpu.memory_space<vmem>>, %arg11: memref<1x1x16x512xf32, #tpu.memory_space<vmem>>) attributes {dimension_semantics = [#tpu.dimension_semantics<parallel>, #tpu.dimension_semantics<parallel>, #tpu.dimension_semantics<parallel>], iteration_bounds = array<i64: 1, 2, 1>, scalar_prefetch = 1 : i64, scratch_operands = 0 : i64, tpu.core_type = #tpu.core_type<tc>, window_params = [{transform_indices = @transform_0, window_bounds = array<i64: 1, 1, 16, 32>}, {transform_indices = @transform_1, window_bounds = array<i64: 1, 1, 32>}, {transform_indices = @transform_2, window_bounds = array<i64: 1, 1, 32>}, {transform_indices = @transform_3, window_bounds = array<i64: 1, 32, 32>}, {transform_indices = @transform_4, window_bounds = array<i64: 1, 1, 32>}, {transform_indices = @transform_5, window_bounds = array<i64: 1, 32, 1024>}, {transform_indices = @transform_6, window_bounds = array<i64: 1, 1, 1024>}, {transform_indices = @transform_7, window_bounds = array<i64: 1, 1, 16, 512>}]} {
    %c0 = arith.constant 0 : index
    %c0_0 = arith.constant 0 : index
    %c0_1 = arith.constant 0 : index
    %c0_2 = arith.constant 0 : index
    %0 = vector.load %arg4[%c0, %c0_0, %c0_1, %c0_2] : memref<1x1x16x32xf32, #tpu.memory_space<vmem>>, vector<1x1x16x32xf32>
    %1 = vector.shape_cast %0 : vector<1x1x16x32xf32> to vector<16x32xf32>
    %cst = arith.constant dense<0.000000e+00> : vector<16xf32>
    %2 = vector.multi_reduction <add>, %1, %cst [1] : vector<16x32xf32> to vector<16xf32>
    %3 = vector.shape_cast %2 : vector<16xf32> to vector<16x1xf32>
    %cst_3 = arith.constant 3.200000e+01 : f32
    %4 = vector.broadcast %cst_3 : f32 to vector<16x1xf32>
    %5 = arith.divf %3, %4 : vector<16x1xf32>
    %6 = vector.broadcast %5 : vector<16x1xf32> to vector<16x32xf32>
    %7 = arith.subf %1, %6 : vector<16x32xf32>
    %8 = arith.mulf %7, %7 : vector<16x32xf32>
    %cst_4 = arith.constant dense<0.000000e+00> : vector<16xf32>
    %9 = vector.multi_reduction <add>, %8, %cst_4 [1] : vector<16x32xf32> to vector<16xf32>
    %10 = vector.shape_cast %9 : vector<16xf32> to vector<16x1xf32>
    %cst_5 = arith.constant 3.200000e+01 : f32
    %11 = vector.broadcast %cst_5 : f32 to vector<16x1xf32>
    %12 = arith.divf %10, %11 : vector<16x1xf32>
    %cst_6 = arith.constant 9.99999974E-6 : f32
    %13 = vector.broadcast %cst_6 : f32 to vector<16x1xf32>
    %14 = arith.addf %12, %13 : vector<16x1xf32>
    %15 = math.rsqrt %14 : vector<16x1xf32>
    %16 = vector.broadcast %15 : vector<16x1xf32> to vector<16x32xf32>
    %17 = arith.mulf %7, %16 : vector<16x32xf32>
    %c0_7 = arith.constant 0 : index
    %c0_8 = arith.constant 0 : index
    %c0_9 = arith.constant 0 : index
    %18 = vector.load %arg5[%c0_7, %c0_8, %c0_9] : memref<1x1x32xf32, #tpu.memory_space<vmem>>, vector<1x1x32xf32>
    %19 = vector.shape_cast %18 : vector<1x1x32xf32> to vector<1x32xf32>
    %20 = vector.broadcast %19 : vector<1x32xf32> to vector<16x32xf32>
    %21 = arith.mulf %17, %20 : vector<16x32xf32>
    %c0_10 = arith.constant 0 : index
    %c0_11 = arith.constant 0 : index
    %c0_12 = arith.constant 0 : index
    %22 = vector.load %arg6[%c0_10, %c0_11, %c0_12] : memref<1x1x32xf32, #tpu.memory_space<vmem>>, vector<1x1x32xf32>
    %23 = vector.shape_cast %22 : vector<1x1x32xf32> to vector<1x32xf32>
    %24 = vector.broadcast %23 : vector<1x32xf32> to vector<16x32xf32>
    %25 = arith.addf %21, %24 : vector<16x32xf32>
    %26 = arith.truncf %25 : vector<16x32xf32> to vector<16x32xbf16>
    %c0_13 = arith.constant 0 : index
    %c0_14 = arith.constant 0 : index
    %c0_15 = arith.constant 0 : index
    %27 = vector.load %arg7[%c0_13, %c0_14, %c0_15] : memref<1x32x32xbf16, #tpu.memory_space<vmem>>, vector<1x32x32xbf16>
    %28 = vector.shape_cast %27 : vector<1x32x32xbf16> to vector<32x32xbf16>
    %cst_16 = arith.constant dense<0.000000e+00> : vector<16x32xf32>
    %29 = tpu.matmul %26, %28, %cst_16 {dimension_numbers = #tpu.dot_dimension_numbers<[1], [0], [0], [1], [0, 0, 1, 1], [], []>} : vector<16x32xbf16>, vector<32x32xbf16>, vector<16x32xf32> -> vector<16x32xf32>
    %c0_17 = arith.constant 0 : index
    %c0_18 = arith.constant 0 : index
    %c0_19 = arith.constant 0 : index
    %30 = vector.load %arg8[%c0_17, %c0_18, %c0_19] : memref<1x1x32xf32, #tpu.memory_space<vmem>>, vector<1x1x32xf32>
    %31 = vector.shape_cast %30 : vector<1x1x32xf32> to vector<1x32xf32>
    %32 = vector.broadcast %31 : vector<1x32xf32> to vector<16x32xf32>
    %33 = arith.addf %29, %32 : vector<16x32xf32>
    %34 = math.tanh %33 : vector<16x32xf32>
    %35 = arith.truncf %34 : vector<16x32xf32> to vector<16x32xbf16>
    %c0_20 = arith.constant 0 : index
    %c0_21 = arith.constant 0 : index
    %c0_22 = arith.constant 0 : index
    %36 = vector.load %arg9[%c0_20, %c0_21, %c0_22] : memref<1x32x1024xbf16, #tpu.memory_space<vmem>>, vector<1x32x1024xbf16>
    %37 = vector.shape_cast %36 : vector<1x32x1024xbf16> to vector<32x1024xbf16>
    %cst_23 = arith.constant dense<0.000000e+00> : vector<16x1024xf32>
    %38 = tpu.matmul %35, %37, %cst_23 {dimension_numbers = #tpu.dot_dimension_numbers<[1], [0], [0], [1], [0, 0, 1, 1], [], []>} : vector<16x32xbf16>, vector<32x1024xbf16>, vector<16x1024xf32> -> vector<16x1024xf32>
    %c0_24 = arith.constant 0 : index
    %c0_25 = arith.constant 0 : index
    %c0_26 = arith.constant 0 : index
    %39 = vector.load %arg10[%c0_24, %c0_25, %c0_26] : memref<1x1x1024xf32, #tpu.memory_space<vmem>>, vector<1x1x1024xf32>
    %40 = vector.shape_cast %39 : vector<1x1x1024xf32> to vector<1x1024xf32>
    %41 = vector.broadcast %40 : vector<1x1024xf32> to vector<16x1024xf32>
    %42 = arith.addf %38, %41 : vector<16x1024xf32>
    %43 = vector.extract_strided_slice %42 {offsets = [0, 0], sizes = [16, 512], strides = [1, 1]} : vector<16x1024xf32> to vector<16x512xf32>
    %44 = vector.extract_strided_slice %42 {offsets = [0, 512], sizes = [16, 512], strides = [1, 1]} : vector<16x1024xf32> to vector<16x512xf32>
    %45 = arith.negf %44 : vector<16x512xf32>
    %46 = math.exp %45 : vector<16x512xf32>
    %cst_27 = arith.constant 1.000000e+00 : f32
    %47 = vector.broadcast %cst_27 : f32 to vector<16x512xf32>
    %48 = arith.addf %47, %46 : vector<16x512xf32>
    %49 = arith.divf %47, %48 : vector<16x512xf32>
    %50 = arith.mulf %43, %49 : vector<16x512xf32>
    %c0_28 = arith.constant 0 : index
    %c0_29 = arith.constant 0 : index
    %c0_30 = arith.constant 0 : index
    %c0_31 = arith.constant 0 : index
    %51 = vector.load %arg11[%c0_28, %c0_29, %c0_30, %c0_31] : memref<1x1x16x512xf32, #tpu.memory_space<vmem>>, vector<1x1x16x512xf32>
    %52 = vector.shape_cast %51 : vector<1x1x16x512xf32> to vector<16x512xf32>
    %53 = vector.shape_cast %50 : vector<16x512xf32> to vector<1x1x16x512xf32>
    tpu.vector_store %arg11[%c0_28, %c0_29, %c0_30, %c0_31], %53 {strides = array<i32>} : memref<1x1x16x512xf32, #tpu.memory_space<vmem>>, vector<1x1x16x512xf32>,
    return
  }
  func.func @transform_0(%arg0: i32, %arg1: i32, %arg2: i32, %arg3: memref<1xi32, #tpu.memory_space<smem>>) -> (i32, i32, i32, i32) {
    %0 = arith.index_cast %arg0 : i32 to index
    %1 = memref.load %arg3[%0] : memref<1xi32, #tpu.memory_space<smem>>
    %c0_i32 = arith.constant 0 : i32
    %c0_i32_0 = arith.constant 0 : i32
    return %arg1, %1, %arg2, %c0_i32 : i32, i32, i32, i32
  }
  func.func @transform_1(%arg0: i32, %arg1: i32, %arg2: i32, %arg3: memref<1xi32, #tpu.memory_space<smem>>) -> (i32, i32, i32) {
    %c0_i32 = arith.constant 0 : i32
    %c0_i32_0 = arith.constant 0 : i32
    %c0_i32_1 = arith.constant 0 : i32
    return %arg0, %c0_i32, %c0_i32_0 : i32, i32, i32
  }
  func.func @transform_2(%arg0: i32, %arg1: i32, %arg2: i32, %arg3: memref<1xi32, #tpu.memory_space<smem>>) -> (i32, i32, i32) {
    %c0_i32 = arith.constant 0 : i32
    %c0_i32_0 = arith.constant 0 : i32
    %c0_i32_1 = arith.constant 0 : i32
    return %arg0, %c0_i32, %c0_i32_0 : i32, i32, i32
  }
  func.func @transform_3(%arg0: i32, %arg1: i32, %arg2: i32, %arg3: memref<1xi32, #tpu.memory_space<smem>>) -> (i32, i32, i32) {
    %c0_i32 = arith.constant 0 : i32
    %c0_i32_0 = arith.constant 0 : i32
    %c0_i32_1 = arith.constant 0 : i32
    return %arg0, %c0_i32, %c0_i32_0 : i32, i32, i32
  }
  func.func @transform_4(%arg0: i32, %arg1: i32, %arg2: i32, %arg3: memref<1xi32, #tpu.memory_space<smem>>) -> (i32, i32, i32) {
    %c0_i32 = arith.constant 0 : i32
    %c0_i32_0 = arith.constant 0 : i32
    %c0_i32_1 = arith.constant 0 : i32
    return %arg0, %c0_i32, %c0_i32_0 : i32, i32, i32
  }
  func.func @transform_5(%arg0: i32, %arg1: i32, %arg2: i32, %arg3: memref<1xi32, #tpu.memory_space<smem>>) -> (i32, i32, i32) {
    %c0_i32 = arith.constant 0 : i32
    %c0_i32_0 = arith.constant 0 : i32
    %c0_i32_1 = arith.constant 0 : i32
    return %arg0, %c0_i32, %c0_i32_0 : i32, i32, i32
  }
  func.func @transform_6(%arg0: i32, %arg1: i32, %arg2: i32, %arg3: memref<1xi32, #tpu.memory_space<smem>>) -> (i32, i32, i32) {
    %c0_i32 = arith.constant 0 : i32
    %c0_i32_0 = arith.constant 0 : i32
    %c0_i32_1 = arith.constant 0 : i32
    return %arg0, %c0_i32, %c0_i32_0 : i32, i32, i32
  }
  func.func @transform_7(%arg0: i32, %arg1: i32, %arg2: i32, %arg3: memref<1xi32, #tpu.memory_space<smem>>) -> (i32, i32, i32, i32) {
    %c0_i32 = arith.constant 0 : i32
    %c0_i32_0 = arith.constant 0 : i32
    return %arg0, %arg1, %arg2, %c0_i32 : i32, i32, i32, i32
  }
}

module attributes {stable_mosaic.version = 11 : i64} {
  func.func @_norm_mlp_glu_kernel(%arg0: i32, %arg1: i32, %arg2: i32, %arg3: memref<3xi32, #tpu.memory_space<smem>>, %arg4: memref<1x1x16x32xf32, #tpu.memory_space<vmem>>, %arg5: memref<1x1x32xf32, #tpu.memory_space<vmem>>, %arg6: memref<1x1x32xf32, #tpu.memory_space<vmem>>, %arg7: memref<1x32x32xbf16, #tpu.memory_space<vmem>>, %arg8: memref<1x1x32xf32, #tpu.memory_space<vmem>>, %arg9: memref<1x32x512xbf16, #tpu.memory_space<vmem>>, %arg10: memref<1x1x512xf32, #tpu.memory_space<vmem>>, %arg11: memref<1x1x16x256xf32, #tpu.memory_space<vmem>>) attributes {dimension_semantics = [#tpu.dimension_semantics<parallel>, #tpu.dimension_semantics<parallel>, #tpu.dimension_semantics<parallel>], iteration_bounds = array<i64: 3, 2, 1>, scalar_prefetch = 1 : i64, scratch_operands = 0 : i64, tpu.core_type = #tpu.core_type<tc>, window_params = [{transform_indices = @transform_0, window_bounds = array<i64: 1, 1, 16, 32>}, {transform_indices = @transform_1, window_bounds = array<i64: 1, 1, 32>}, {transform_indices = @transform_2, window_bounds = array<i64: 1, 1, 32>}, {transform_indices = @transform_3, window_bounds = array<i64: 1, 32, 32>}, {transform_indices = @transform_4, window_bounds = array<i64: 1, 1, 32>}, {transform_indices = @transform_5, window_bounds = array<i64: 1, 32, 512>}, {transform_indices = @transform_6, window_bounds = array<i64: 1, 1, 512>}, {transform_indices = @transform_7, window_bounds = array<i64: 1, 1, 16, 256>}]} {
    %c0 = arith.constant 0 : index
    %c0_0 = arith.constant 0 : index
    %c0_1 = arith.constant 0 : index
    %c0_2 = arith.constant 0 : index
    %0 = vector.load %arg4[%c0, %c0_0, %c0_1, %c0_2] : memref<1x1x16x32xf32, #tpu.memory_space<vmem>>, vector<1x1x16x32xf32>
    %1 = vector.shape_cast %0 : vector<1x1x16x32xf32> to vector<16x32xf32>
    %cst = arith.constant dense<0.000000e+00> : vector<16xf32>
    %2 = vector.multi_reduction <add>, %1, %cst [1] : vector<16x32xf32> to vector<16xf32>
    %3 = vector.shape_cast %2 : vector<16xf32> to vector<16x1xf32>
    %cst_3 = arith.constant 3.200000e+01 : f32
    %4 = vector.broadcast %cst_3 : f32 to vector<16x1xf32>
    %5 = arith.divf %3, %4 : vector<16x1xf32>
    %6 = vector.broadcast %5 : vector<16x1xf32> to vector<16x32xf32>
    %7 = arith.subf %1, %6 : vector<16x32xf32>
    %8 = arith.mulf %7, %7 : vector<16x32xf32>
    %cst_4 = arith.constant dense<0.000000e+00> : vector<16xf32>
    %9 = vector.multi_reduction <add>, %8, %cst_4 [1] : vector<16x32xf32> to vector<16xf32>
    %10 = vector.shape_cast %9 : vector<16xf32> to vector<16x1xf32>
    %cst_5 = arith.constant 3.200000e+01 : f32
    %11 = vector.broadcast %cst_5 : f32 to vector<16x1xf32>
    %12 = arith.divf %10, %11 : vector<16x1xf32>
    %cst_6 = arith.constant 9.99999974E-6 : f32
    %13 = vector.broadcast %cst_6 : f32 to vector<16x1xf32>
    %14 = arith.addf %12, %13 : vector<16x1xf32>
    %15 = math.rsqrt %14 : vector<16x1xf32>
    %16 = vector.broadcast %15 : vector<16x1xf32> to vector<16x32xf32>
    %17 = arith.mulf %7, %16 : vector<16x32xf32>
    %c0_7 = arith.constant 0 : index
    %c0_8 = arith.constant 0 : index
    %c0_9 = arith.constant 0 : index
    %18 = vector.load %arg5[%c0_7, %c0_8, %c0_9] : memref<1x1x32xf32, #tpu.memory_space<vmem>>, vector<1x1x32xf32>
    %19 = vector.shape_cast %18 : vector<1x1x32xf32> to vector<1x32xf32>
    %20 = vector.broadcast %19 : vector<1x32xf32> to vector<16x32xf32>
    %21 = arith.mulf %17, %20 : vector<16x32xf32>
    %c0_10 = arith.constant 0 : index
    %c0_11 = arith.constant 0 : index
    %c0_12 = arith.constant 0 : index
    %22 = vector.load %arg6[%c0_10, %c0_11, %c0_12] : memref<1x1x32xf32, #tpu.memory_space<vmem>>, vector<1x1x32xf32>
    %23 = vector.shape_cast %22 : vector<1x1x32xf32> to vector<1x32xf32>
    %24 = vector.broadcast %23 : vector<1x32xf32> to vector<16x32xf32>
    %25 = arith.addf %21, %24 : vector<16x32xf32>
    %26 = arith.truncf %25 : vector<16x32xf32> to vector<16x32xbf16>
    %c0_13 = arith.constant 0 : index
    %c0_14 = arith.constant 0 : index
    %c0_15 = arith.constant 0 : index
    %27 = vector.load %arg7[%c0_13, %c0_14, %c0_15] : memref<1x32x32xbf16, #tpu.memory_space<vmem>>, vector<1x32x32xbf16>
    %28 = vector.shape_cast %27 : vector<1x32x32xbf16> to vector<32x32xbf16>
    %cst_16 = arith.constant dense<0.000000e+00> : vector<16x32xf32>
    %29 = tpu.matmul %26, %28, %cst_16 {dimension_numbers = #tpu.dot_dimension_numbers<[1], [0], [0], [1], [0, 0, 1, 1], [], []>} : vector<16x32xbf16>, vector<32x32xbf16>, vector<16x32xf32> -> vector<16x32xf32>
    %c0_17 = arith.constant 0 : index
    %c0_18 = arith.constant 0 : index
    %c0_19 = arith.constant 0 : index
    %30 = vector.load %arg8[%c0_17, %c0_18, %c0_19] : memref<1x1x32xf32, #tpu.memory_space<vmem>>, vector<1x1x32xf32>
    %31 = vector.shape_cast %30 : vector<1x1x32xf32> to vector<1x32xf32>
    %32 = vector.broadcast %31 : vector<1x32xf32> to vector<16x32xf32>
    %33 = arith.addf %29, %32 : vector<16x32xf32>
    %34 = math.tanh %33 : vector<16x32xf32>
    %35 = arith.truncf %34 : vector<16x32xf32> to vector<16x32xbf16>
    %c0_20 = arith.constant 0 : index
    %c0_21 = arith.constant 0 : index
    %c0_22 = arith.constant 0 : index
    %36 = vector.load %arg9[%c0_20, %c0_21, %c0_22] : memref<1x32x512xbf16, #tpu.memory_space<vmem>>, vector<1x32x512xbf16>
    %37 = vector.shape_cast %36 : vector<1x32x512xbf16> to vector<32x512xbf16>
    %cst_23 = arith.constant dense<0.000000e+00> : vector<16x512xf32>
    %38 = tpu.matmul %35, %37, %cst_23 {dimension_numbers = #tpu.dot_dimension_numbers<[1], [0], [0], [1], [0, 0, 1, 1], [], []>} : vector<16x32xbf16>, vector<32x512xbf16>, vector<16x512xf32> -> vector<16x512xf32>
    %c0_24 = arith.constant 0 : index
    %c0_25 = arith.constant 0 : index
    %c0_26 = arith.constant 0 : index
    %39 = vector.load %arg10[%c0_24, %c0_25, %c0_26] : memref<1x1x512xf32, #tpu.memory_space<vmem>>, vector<1x1x512xf32>
    %40 = vector.shape_cast %39 : vector<1x1x512xf32> to vector<1x512xf32>
    %41 = vector.broadcast %40 : vector<1x512xf32> to vector<16x512xf32>
    %42 = arith.addf %38, %41 : vector<16x512xf32>
    %43 = vector.extract_strided_slice %42 {offsets = [0, 0], sizes = [16, 256], strides = [1, 1]} : vector<16x512xf32> to vector<16x256xf32>
    %44 = vector.extract_strided_slice %42 {offsets = [0, 256], sizes = [16, 256], strides = [1, 1]} : vector<16x512xf32> to vector<16x256xf32>
    %45 = arith.negf %44 : vector<16x256xf32>
    %46 = math.exp %45 : vector<16x256xf32>
    %cst_27 = arith.constant 1.000000e+00 : f32
    %47 = vector.broadcast %cst_27 : f32 to vector<16x256xf32>
    %48 = arith.addf %47, %46 : vector<16x256xf32>
    %49 = arith.divf %47, %48 : vector<16x256xf32>
    %50 = arith.mulf %43, %49 : vector<16x256xf32>
    %c0_28 = arith.constant 0 : index
    %c0_29 = arith.constant 0 : index
    %c0_30 = arith.constant 0 : index
    %c0_31 = arith.constant 0 : index
    %51 = vector.load %arg11[%c0_28, %c0_29, %c0_30, %c0_31] : memref<1x1x16x256xf32, #tpu.memory_space<vmem>>, vector<1x1x16x256xf32>
    %52 = vector.shape_cast %51 : vector<1x1x16x256xf32> to vector<16x256xf32>
    %53 = vector.shape_cast %50 : vector<16x256xf32> to vector<1x1x16x256xf32>
    tpu.vector_store %arg11[%c0_28, %c0_29, %c0_30, %c0_31], %53 {strides = array<i32>} : memref<1x1x16x256xf32, #tpu.memory_space<vmem>>, vector<1x1x16x256xf32>,
    return
  }
  func.func @transform_0(%arg0: i32, %arg1: i32, %arg2: i32, %arg3: memref<3xi32, #tpu.memory_space<smem>>) -> (i32, i32, i32, i32) {
    %0 = arith.index_cast %arg0 : i32 to index
    %1 = memref.load %arg3[%0] : memref<3xi32, #tpu.memory_space<smem>>
    %c0_i32 = arith.constant 0 : i32
    %c0_i32_0 = arith.constant 0 : i32
    return %arg1, %1, %arg2, %c0_i32 : i32, i32, i32, i32
  }
  func.func @transform_1(%arg0: i32, %arg1: i32, %arg2: i32, %arg3: memref<3xi32, #tpu.memory_space<smem>>) -> (i32, i32, i32) {
    %c0_i32 = arith.constant 0 : i32
    %c0_i32_0 = arith.constant 0 : i32
    %c0_i32_1 = arith.constant 0 : i32
    return %arg0, %c0_i32, %c0_i32_0 : i32, i32, i32
  }
  func.func @transform_2(%arg0: i32, %arg1: i32, %arg2: i32, %arg3: memref<3xi32, #tpu.memory_space<smem>>) -> (i32, i32, i32) {
    %c0_i32 = arith.constant 0 : i32
    %c0_i32_0 = arith.constant 0 : i32
    %c0_i32_1 = arith.constant 0 : i32
    return %arg0, %c0_i32, %c0_i32_0 : i32, i32, i32
  }
  func.func @transform_3(%arg0: i32, %arg1: i32, %arg2: i32, %arg3: memref<3xi32, #tpu.memory_space<smem>>) -> (i32, i32, i32) {
    %c0_i32 = arith.constant 0 : i32
    %c0_i32_0 = arith.constant 0 : i32
    %c0_i32_1 = arith.constant 0 : i32
    return %arg0, %c0_i32, %c0_i32_0 : i32, i32, i32
  }
  func.func @transform_4(%arg0: i32, %arg1: i32, %arg2: i32, %arg3: memref<3xi32, #tpu.memory_space<smem>>) -> (i32, i32, i32) {
    %c0_i32 = arith.constant 0 : i32
    %c0_i32_0 = arith.constant 0 : i32
    %c0_i32_1 = arith.constant 0 : i32
    return %arg0, %c0_i32, %c0_i32_0 : i32, i32, i32
  }
  func.func @transform_5(%arg0: i32, %arg1: i32, %arg2: i32, %arg3: memref<3xi32, #tpu.memory_space<smem>>) -> (i32, i32, i32) {
    %c0_i32 = arith.constant 0 : i32
    %c0_i32_0 = arith.constant 0 : i32
    %c0_i32_1 = arith.constant 0 : i32
    return %arg0, %c0_i32, %c0_i32_0 : i32, i32, i32
  }
  func.func @transform_6(%arg0: i32, %arg1: i32, %arg2: i32, %arg3: memref<3xi32, #tpu.memory_space<smem>>) -> (i32, i32, i32) {
    %c0_i32 = arith.constant 0 : i32
    %c0_i32_0 = arith.constant 0 : i32
    %c0_i32_1 = arith.constant 0 : i32
    return %arg0, %c0_i32, %c0_i32_0 : i32, i32, i32
  }
  func.func @transform_7(%arg0: i32, %arg1: i32, %arg2: i32, %arg3: memref<3xi32, #tpu.memory_space<smem>>) -> (i32, i32, i32, i32) {
    %c0_i32 = arith.constant 0 : i32
    %c0_i32_0 = arith.constant 0 : i32
    return %arg0, %arg1, %arg2, %c0_i32 : i32, i32, i32, i32
  }
}

</mosaic_0001>

<llo_original>
// kernel: custom-call
$region0: #{custom-call}
  %s0 = inlined_call_operand.vmem [shape: f32[2,2,100,12], index: 0, kind: input, shape index: {}]
  %s1 = inlined_call_operand.vmem [shape: f32[2,2,100,12], index: 1, kind: input, shape index: {}]
  %s2 = inlined_call_operand.vmem [shape: c64[2,2,100,12], index: 2, kind: output, shape index: {}]
  %s4 = scalar_lea.vmem %s2, 48
  %v5 = vld [vmem:[%s0] sm:$0xff]
  %6 = vst [vmem:[%s2] sm:$0xff] %v5
  %s7 = scalar_lea.vmem %s2, 8
  %s8 = scalar_lea.vmem %s0, 8
  %v9 = vld [vmem:[%s8] sm:$0xff]
  %10 = vst [vmem:[%s7] sm:$0xff] %v9
  %s11 = scalar_lea.vmem %s2, 16
  %s12 = scalar_lea.vmem %s0, 16
  %v13 = vld [vmem:[%s12] sm:$0xff]
  %14 = vst [vmem:[%s11] sm:$0xff] %v13
  %s15 = scalar_lea.vmem %s2, 24
  %s16 = scalar_lea.vmem %s0, 24
  %v17 = vld [vmem:[%s16] sm:$0xff]
  %18 = vst [vmem:[%s15] sm:$0xff] %v17
  %s19 = scalar_lea.vmem %s2, 32
  %s20 = scalar_lea.vmem %s0, 32
  %v21 = vld [vmem:[%s20] sm:$0xff]
  %22 = vst [vmem:[%s19] sm:$0xff] %v21
  %s23 = scalar_lea.vmem %s2, 40
  %s24 = scalar_lea.vmem %s0, 40
  %v25 = vld [vmem:[%s24] sm:$0xff]
  %26 = vst [vmem:[%s23] sm:$0xff] %v25
  %v27 = vld [vmem:[%s1] sm:$0xff]
  %28 = vst [vmem:[%s4] sm:$0xff] %v27
  %s29 = scalar_lea.vmem %s4, 8
  %s30 = scalar_lea.vmem %s1, 8
  %v31 = vld [vmem:[%s30] sm:$0xff]
  %32 = vst [vmem:[%s29] sm:$0xff] %v31
  %s33 = scalar_lea.vmem %s4, 16
  %s34 = scalar_lea.vmem %s1, 16
  %v35 = vld [vmem:[%s34] sm:$0xff]
  %36 = vst [vmem:[%s33] sm:$0xff] %v35
  %s37 = scalar_lea.vmem %s4, 24
  %s38 = scalar_lea.vmem %s1, 24
  %v39 = vld [vmem:[%s38] sm:$0xff]
  %40 = vst [vmem:[%s37] sm:$0xff] %v39
  %s41 = scalar_lea.vmem %s4, 32
  %s42 = scalar_lea.vmem %s1, 32
  %v43 = vld [vmem:[%s42] sm:$0xff]
  %44 = vst [vmem:[%s41] sm:$0xff] %v43
  %s45 = scalar_lea.vmem %s4, 40
  %s46 = scalar_lea.vmem %s1, 40
  %v47 = vld [vmem:[%s46] sm:$0xff]
  %48 = vst [vmem:[%s45] sm:$0xff] %v47

// kernel: _lambda_.2
$region0: #{_lambda_.2}
  #allocation0 [shape = 'u32[]', space=smem, size = 0x4, offset = 0x4, fixed_abs, tag = 'smem constant byte address 0x4 - core index']
  #allocation1 [shape = 'u32[144,128]{1,0:T(1,128)}', space=vmem, size = 0x12000, scoped, tag = 'internal scratch']
  #allocation2 [shape = 's32[1]{0}', space=sflag, size = 0x4, scoped, tag = 'scoped memory for _lambda_.2']
  #allocation3 [shape = 'u8[512]{0}', space=smem, size = 0x200, scoped, tag = 'prefetched SMEM operand 0']
  %s0 = inlined_call_operand.hbm [shape: s32[3], index: 0, kind: input, shape index: {}]
  %s1 = inlined_call_operand.hbm [shape: f32[2,4,16,32], index: 1, kind: input, shape index: {}]
  %s2 = inlined_call_operand.hbm [shape: f32[3,1,32], index: 2, kind: input, shape index: {}]
  %s3 = inlined_call_operand.hbm [shape: f32[3,1,32], index: 3, kind: input, shape index: {}]
  %s4 = inlined_call_operand.hbm [shape: bf16[3,32,32], index: 4, kind: input, shape index: {}]
  %s5 = inlined_call_operand.hbm [shape: f32[3,1,32], index: 5, kind: input, shape index: {}]
  %s6 = inlined_call_operand.hbm [shape: bf16[3,32,512], index: 6, kind: input, shape index: {}]
  %s7 = inlined_call_operand.hbm [shape: f32[3,1,512], index: 7, kind: input, shape index: {}]
  %s8 = inlined_call_operand.hbm [shape: f32[3,2,16,256], index: 8, kind: output, shape index: {}]
  %s9 = sld [smem:[#allocation0]]
  $region89: #{_lambda_.2} parent=0
    _
  %s11 = ssub.s32 1, %s9
  %s12 = scalar_select 0, %s11, %s9
  %14 = dma.hbm_to_smem %s0, 16, [#allocation3], [#allocation2]
  %15 = dma.done [#allocation2], 16
  %16 = sfence
  $region1: #{_lambda_.2} parent=0
    #allocation4 [shape = 'u8[16384]{0}', space=vmem, size = 0x4000, scoped, tag = 'input window, operand 1']
    #allocation5 [shape = 's32[2]{0}', space=sflag, size = 0x8, scoped, tag = 'scoped memory for _lambda_.2']
    #allocation6 [shape = 's32[2]{0}', space=sflag, size = 0x8, scoped, tag = 'scoped memory for _lambda_.2']
    #allocation7 [shape = 'u8[1024]{0}', space=vmem, size = 0x400, scoped, tag = 'input window, operand 2']
    #allocation8 [shape = 's32[2]{0}', space=sflag, size = 0x8, scoped, tag = 'scoped memory for _lambda_.2']
    #allocation9 [shape = 'u8[1024]{0}', space=vmem, size = 0x400, scoped, tag = 'input window, operand 3']
    #allocation10 [shape = 'u8[16384]{0}', space=vmem, size = 0x4000, scoped, tag = 'input window, operand 4']
    #allocation11 [shape = 's32[2]{0}', space=sflag, size = 0x8, scoped, tag = 'scoped memory for _lambda_.2']
    #allocation12 [shape = 'u8[1024]{0}', space=vmem, size = 0x400, scoped, tag = 'input window, operand 5']
    #allocation13 [shape = 'u8[65536]{0}', space=vmem, size = 0x10000, scoped, tag = 'input window, operand 6']
    #allocation14 [shape = 's32[2]{0}', space=sflag, size = 0x8, scoped, tag = 'scoped memory for _lambda_.2']
    #allocation15 [shape = 'u8[4096]{0}', space=vmem, size = 0x1000, scoped, tag = 'input window, operand 7']
    #allocation16 [shape = 'u8[32768]{0}', space=vmem, size = 0x8000, scoped, tag = 'output window, operand 0']
    %17 = vsyncpa [#allocation5], 0
    %s18 = scalar_lea.sflag [#allocation5], 1
    %19 = vsyncpa %s18, 0
    %20 = vsyncpa [#allocation8], 0
    %s21 = scalar_lea.sflag [#allocation8], 1
    %22 = vsyncpa %s21, 0
    %23 = vsyncpa [#allocation11], 0
    %s24 = scalar_lea.sflag [#allocation11], 1
    %25 = vsyncpa %s24, 0
    %26 = vsyncpa [#allocation14], 0
    %s27 = scalar_lea.sflag [#allocation14], 1
    %28 = vsyncpa %s27, 0
    %29 = vsyncpa [#allocation6], 0
    %s30 = scalar_lea.sflag [#allocation6], 1
    %31 = vsyncpa %s30, 0
    loop: start=0, step=1, limit=8
    $region2: #{_lambda_.2} parent=1 // loop_pre_header
      _
    $region3: #{_lambda_.2} parent=1 // loop_header
      %s33 = sphi 0, %s37
      %p34 = scmp.ge.s32.totalorder %s33, 8
      %s40 = sphi 0, %s59
      %s41 = sphi 0, %s55
      %s42 = sphi 0, %s51
      %s43 = sphi 0, %s40
      %s44 = sphi 0, %s41
      %s45 = sphi 0, %s42
      %s46 = sphi 0, %s43
      %s47 = sphi 0, %s44
      %s48 = sphi 0, %s45
      %s68 = sphi 0, %s70
      %s71 = sphi 0, %s68
      %s72 = sphi 0, %s71
      %s88 = sphi 0, %s72
      %s94 = sphi 0, %s96
      %s97 = sphi 0, %s94
      %s98 = sphi 0, %s97
      %s114 = sphi 0, %s98
      %s120 = sphi 0, %s122
      %s123 = sphi 0, %s120
      %s124 = sphi 0, %s123
      %s140 = sphi 0, %s124
      %s146 = sphi 0, %s148
      %s149 = sphi 0, %s146
      %s150 = sphi 0, %s149
      %s166 = sphi 0, %s150
      %s172 = sphi 0, %s174
      %s175 = sphi 0, %s172
      %s176 = sphi 0, %s175
      %s192 = sphi 0, %s176
      %s198 = sphi 0, %s200
      %s201 = sphi 0, %s198
      %s202 = sphi 0, %s201
      %s218 = sphi 0, %s202
      %s224 = sphi 0, %s226
      %s227 = sphi 0, %s224
      %s228 = sphi 0, %s227
      %s244 = sphi 0, %s228
      %s254 = sphi 0, %s256
      %s257 = sphi 0, %s254
      %s258 = sphi 0, %s257
      %s274 = sphi 0, %s258
    $region4: #{_lambda_.2} parent=1 // loop_header_branch
      %36 = sbr.rel (%p34) target = $region8
    $region5: #{_lambda_.2} parent=1 // loop_body
      %s38 = ssub.s32 %s33, 1
      %s39 = ssub.s32 %s33, 2
      %s49 = sadd.s32 1, %s42
      %p50 = scmp.ge.s32.totalorder %s49, 1
      %s51 = scalar_select %p50, 0, %s49
      %s52 = sadd.s32 1, %s41
      %s53 = scalar_select %p50, %s52, %s41
      %p54 = scmp.ge.s32.totalorder %s53, 2
      %s55 = scalar_select %p54, 0, %s53
      %s56 = sadd.s32 1, %s40
      %s57 = scalar_select %p54, %s56, %s40
      %p58 = scmp.ge.s32.totalorder %s57, 3
      %s59 = scalar_select %p58, 0, %s57
      %s60 = sld [smem:[#allocation3 + %s40]]
      %s61 = sld [smem:[#allocation3 + %s59]]
      %s62 = ssub.s32 %s41, %s55
      %s63 = ssub.s32 %s60, %s61
      %s64 = sor.u32 %s62, %s63
      %s65 = ssub.s32 %s42, %s51
      %s66 = sor.u32 %s64, %s65
      %p67 = scmp.eq.s32.totalorder %s66, 0
      %s69 = sadd.s32 %s68, 1
      %s70 = scalar_select %p67, %s68, %s69
      %p73 = pneg %p67
      %p74 = scmp.eq.s32.totalorder %s33, 5
      %p75 = por %p73, %p74
      %p76 = scmp.ne.s32.totalorder %s68, %s71
      %p77 = scmp.eq.s32.totalorder %s33, 0
      %p78 = por %p76, %p77
      %p79 = scmp.ne.s32.totalorder %s68, %s71
      %p80 = scmp.eq.s32.totalorder %s38, 5
      %p81 = por %p79, %p80
      %p82 = scmp.ne.s32.totalorder %s71, %s72
      %p83 = scmp.eq.s32.totalorder %s38, 0
      %p84 = por %p82, %p83
      %p85 = scmp.ne.s32.totalorder %s71, %s72
      %p86 = scmp.eq.s32.totalorder %s39, 5
      %p87 = por %p85, %p86
      %p89 = scmp.ne.s32.totalorder %s72, %s88
      %p90 = scmp.eq.s32.totalorder %s39, 0
      %p91 = por %p89, %p90
      %s92 = ssub.s32 %s40, %s59
      %p93 = scmp.eq.s32.totalorder %s92, 0
      %s95 = sadd.s32 %s94, 1
      %s96 = scalar_select %p93, %s94, %s95
      %p99 = pneg %p93
      %p100 = scmp.eq.s32.totalorder %s33, 5
      %p101 = por %p99, %p100
      %p102 = scmp.ne.s32.totalorder %s94, %s97
      %p103 = scmp.eq.s32.totalorder %s33, 0
      %p104 = por %p102, %p103
      %p105 = scmp.ne.s32.totalorder %s94, %s97
      %p106 = scmp.eq.s32.totalorder %s38, 5
      %p107 = por %p105, %p106
      %p108 = scmp.ne.s32.totalorder %s97, %s98
      %p109 = scmp.eq.s32.totalorder %s38, 0
      %p110 = por %p108, %p109
      %p111 = scmp.ne.s32.totalorder %s97, %s98
      %p112 = scmp.eq.s32.totalorder %s39, 5
      %p113 = por %p111, %p112
      %p115 = scmp.ne.s32.totalorder %s98, %s114
      %p116 = scmp.eq.s32.totalorder %s39, 0
      %p117 = por %p115, %p116
      %s118 = ssub.s32 %s40, %s59
      %p119 = scmp.eq.s32.totalorder %s118, 0
      %s121 = sadd.s32 %s120, 1
      %s122 = scalar_select %p119, %s120, %s121
      %p125 = pneg %p119
      %p126 = scmp.eq.s32.totalorder %s33, 5
      %p127 = por %p125, %p126
      %p128 = scmp.ne.s32.totalorder %s120, %s123
      %p129 = scmp.eq.s32.totalorder %s33, 0
      %p130 = por %p128, %p129
      %p131 = scmp.ne.s32.totalorder %s120, %s123
      %p132 = scmp.eq.s32.totalorder %s38, 5
      %p133 = por %p131, %p132
      %p134 = scmp.ne.s32.totalorder %s123, %s124
      %p135 = scmp.eq.s32.totalorder %s38, 0
      %p136 = por %p134, %p135
      %p137 = scmp.ne.s32.totalorder %s123, %s124
      %p138 = scmp.eq.s32.totalorder %s39, 5
      %p139 = por %p137, %p138
      %p141 = scmp.ne.s32.totalorder %s124, %s140
      %p142 = scmp.eq.s32.totalorder %s39, 0
      %p143 = por %p141, %p142
      %s144 = ssub.s32 %s40, %s59
      %p145 = scmp.eq.s32.totalorder %s144, 0
      %s147 = sadd.s32 %s146, 1
      %s148 = scalar_select %p145, %s146, %s147
      %p151 = pneg %p145
      %p152 = scmp.eq.s32.totalorder %s33, 5
      %p153 = por %p151, %p152
      %p154 = scmp.ne.s32.totalorder %s146, %s149
      %p155 = scmp.eq.s32.totalorder %s33, 0
      %p156 = por %p154, %p155
      %p157 = scmp.ne.s32.totalorder %s146, %s149
      %p158 = scmp.eq.s32.totalorder %s38, 5
      %p159 = por %p157, %p158
      %p160 = scmp.ne.s32.totalorder %s149, %s150
      %p161 = scmp.eq.s32.totalorder %s38, 0
      %p162 = por %p160, %p161
      %p163 = scmp.ne.s32.totalorder %s149, %s150
      %p164 = scmp.eq.s32.totalorder %s39, 5
      %p165 = por %p163, %p164
      %p167 = scmp.ne.s32.totalorder %s150, %s166
      %p168 = scmp.eq.s32.totalorder %s39, 0
      %p169 = por %p167, %p168
      %s170 = ssub.s32 %s40, %s59
      %p171 = scmp.eq.s32.totalorder %s170, 0
      %s173 = sadd.s32 %s172, 1
      %s174 = scalar_select %p171, %s172, %s173
      %p177 = pneg %p171
      %p178 = scmp.eq.s32.totalorder %s33, 5
      %p179 = por %p177, %p178
      %p180 = scmp.ne.s32.totalorder %s172, %s175
      %p181 = scmp.eq.s32.totalorder %s33, 0
      %p182 = por %p180, %p181
      %p183 = scmp.ne.s32.totalorder %s172, %s175
      %p184 = scmp.eq.s32.totalorder %s38, 5
      %p185 = por %p183, %p184
      %p186 = scmp.ne.s32.totalorder %s175, %s176
      %p187 = scmp.eq.s32.totalorder %s38, 0
      %p188 = por %p186, %p187
      %p189 = scmp.ne.s32.totalorder %s175, %s176
      %p190 = scmp.eq.s32.totalorder %s39, 5
      %p191 = por %p189, %p190
      %p193 = scmp.ne.s32.totalorder %s176, %s192
      %p194 = scmp.eq.s32.totalorder %s39, 0
      %p195 = por %p193, %p194
      %s196 = ssub.s32 %s40, %s59
      %p197 = scmp.eq.s32.totalorder %s196, 0
      %s199 = sadd.s32 %s198, 1
      %s200 = scalar_select %p197, %s198, %s199
      %p203 = pneg %p197
      %p204 = scmp.eq.s32.totalorder %s33, 5
      %p205 = por %p203, %p204
      %p206 = scmp.ne.s32.totalorder %s198, %s201
      %p207 = scmp.eq.s32.totalorder %s33, 0
      %p208 = por %p206, %p207
      %p209 = scmp.ne.s32.totalorder %s198, %s201
      %p210 = scmp.eq.s32.totalorder %s38, 5
      %p211 = por %p209, %p210
      %p212 = scmp.ne.s32.totalorder %s201, %s202
      %p213 = scmp.eq.s32.totalorder %s38, 0
      %p214 = por %p212, %p213
      %p215 = scmp.ne.s32.totalorder %s201, %s202
      %p216 = scmp.eq.s32.totalorder %s39, 5
      %p217 = por %p215, %p216
      %p219 = scmp.ne.s32.totalorder %s202, %s218
      %p220 = scmp.eq.s32.totalorder %s39, 0
      %p221 = por %p219, %p220
      %s222 = ssub.s32 %s40, %s59
      %p223 = scmp.eq.s32.totalorder %s222, 0
      %s225 = sadd.s32 %s224, 1
      %s226 = scalar_select %p223, %s224, %s225
      %p229 = pneg %p223
      %p230 = scmp.eq.s32.totalorder %s33, 5
      %p231 = por %p229, %p230
      %p232 = scmp.ne.s32.totalorder %s224, %s227
      %p233 = scmp.eq.s32.totalorder %s33, 0
      %p234 = por %p232, %p233
      %p235 = scmp.ne.s32.totalorder %s224, %s227
      %p236 = scmp.eq.s32.totalorder %s38, 5
      %p237 = por %p235, %p236
      %p238 = scmp.ne.s32.totalorder %s227, %s228
      %p239 = scmp.eq.s32.totalorder %s38, 0
      %p240 = por %p238, %p239
      %p241 = scmp.ne.s32.totalorder %s227, %s228
      %p242 = scmp.eq.s32.totalorder %s39, 5
      %p243 = por %p241, %p242
      %p245 = scmp.ne.s32.totalorder %s228, %s244
      %p246 = scmp.eq.s32.totalorder %s39, 0
      %p247 = por %p245, %p246
      %s248 = ssub.s32 %s40, %s59
      %s249 = ssub.s32 %s41, %s55
      %s250 = sor.u32 %s248, %s249
      %s251 = ssub.s32 %s42, %s51
      %s252 = sor.u32 %s250, %s251
      %p253 = scmp.eq.s32.totalorder %s252, 0
      %s255 = sadd.s32 %s254, 1
      %s256 = scalar_select %p253, %s254, %s255
      %p259 = pneg %p253
      %p260 = scmp.eq.s32.totalorder %s33, 5
      %p261 = por %p259, %p260
      %p262 = scmp.ne.s32.totalorder %s254, %s257
      %p263 = scmp.eq.s32.totalorder %s33, 0
      %p264 = por %p262, %p263
      %p265 = scmp.ne.s32.totalorder %s254, %s257
      %p266 = scmp.eq.s32.totalorder %s38, 5
      %p267 = por %p265, %p266
      %p268 = scmp.ne.s32.totalorder %s257, %s258
      %p269 = scmp.eq.s32.totalorder %s38, 0
      %p270 = por %p268, %p269
      %p271 = scmp.ne.s32.totalorder %s257, %s258
      %p272 = scmp.eq.s32.totalorder %s39, 5
      %p273 = por %p271, %p272
      %p275 = scmp.ne.s32.totalorder %s258, %s274
      %p276 = scmp.eq.s32.totalorder %s39, 0
      %p277 = por %p275, %p276
      %p278 = scmp.le.s32.totalorder 1, %s33
      %p279 = scmp.lt.s32.totalorder %s33, 7
      %p280 = pnand %p278, %p279
      %p281 = pneg %p280
      // Predicated region
      $region9: #{_lambda_.2} parent=5 // pred_check
        _
      $region10: #{_lambda_.2} parent=5 // pred_check_branch
        %283 = sbr.rel (%p280) target = $region12
      $region11: #{_lambda_.2} parent=5 // pred_region
        %s284 = ssub.s32 %s33, 1
      $region12: #{_lambda_.2} parent=5 // pred_fallthru
        _
      %p285 = scmp.lt.s32.totalorder %s33, 6
      // Predicated region
      $region13: #{_lambda_.2} parent=5 // pred_check
        %p286 = pneg %p285
      $region14: #{_lambda_.2} parent=5 // pred_check_branch
        %288 = sbr.rel (%p286) target = $region16
      $region15: #{_lambda_.2} parent=5 // pred_region
        // Predicated region
        $region17: #{_lambda_.2} parent=15 // pred_check
          %p289 = pneg %p78
        $region18: #{_lambda_.2} parent=15 // pred_check_branch
          %291 = sbr.rel (%p289) target = $region20
        $region19: #{_lambda_.2} parent=15 // pred_region
          %s292 = sand.u32 %s68, 1
          %s293 = scalar_lea.sflag [#allocation5], %s292
          %s294 = sand.u32 %s68, 1
          %s295 = smul.addr %s294, 16
          %s296 = scalar_lea.vmem [#allocation4], %s295
          %s297 = sld [smem:[#allocation3 + %s40]]
          %s298 = smul.u32 2, %s42
          %s300 = ssub.s32 256, 256
          %301 = vsyncadd %s293, %s300
          %s302 = smul.addr %s297, 2
          %s303 = sadd.s32 %s298, %s302
          %s304 = smul.addr %s41, 8
          %s305 = sadd.s32 %s303, %s304
          %s306 = smul.addr %s305, 128
          %s307 = scalar_lea.hbm %s1, %s306
          %s308 = sshll.u32 %s296, 4
          %s309 = int_to_ptr.vmem [resolvable:$true] %s308
          %314 = dma.hbm_to_vmem [thread:$0]  %s307, 256, %s309, %s293, 128, 128, 8
        $region20: #{_lambda_.2} parent=15 // pred_fallthru
          _
        // Predicated region
        $region21: #{_lambda_.2} parent=15 // pred_check
          %p315 = pneg %p104
        $region22: #{_lambda_.2} parent=15 // pred_check_branch
          %317 = sbr.rel (%p315) target = $region24
        $region23: #{_lambda_.2} parent=15 // pred_region
          %s318 = sand.u32 %s33, 1
          %s319 = scalar_lea.sflag [#allocation8], %s318
          %s320 = sand.u32 %s94, 1
          %s321 = scalar_lea.vmem [#allocation7], %s320
          %s323 = ssub.s32 16, 16
          %324 = vsyncadd %s319, %s323
          %s325 = smul.addr %s40, 16
          %s326 = scalar_lea.hbm %s2, %s325
          %s328 = sshll.u32 %s321, 4
          %s329 = int_to_ptr.vmem [resolvable:$true] %s328
          %331 = dma.hbm_to_vmem [thread:$0]  %s326, 16, %s329, %s319
        $region24: #{_lambda_.2} parent=15 // pred_fallthru
          _
        // Predicated region
        $region25: #{_lambda_.2} parent=15 // pred_check
          %p332 = pneg %p130
        $region26: #{_lambda_.2} parent=15 // pred_check_branch
          %334 = sbr.rel (%p332) target = $region28
        $region27: #{_lambda_.2} parent=15 // pred_region
          %s335 = sand.u32 %s33, 1
          %s336 = scalar_lea.sflag [#allocation8], %s335
          %s337 = sand.u32 %s120, 1
          %s338 = scalar_lea.vmem [#allocation9], %s337
          %s340 = ssub.s32 16, 16
          %341 = vsyncadd %s336, %s340
          %s342 = smul.addr %s40, 16
          %s343 = scalar_lea.hbm %s3, %s342
          %s345 = sshll.u32 %s338, 4
          %s346 = int_to_ptr.vmem [resolvable:$true] %s345
          %348 = dma.hbm_to_vmem [thread:$0]  %s343, 16, %s346, %s336
        $region28: #{_lambda_.2} parent=15 // pred_fallthru
          _
        // Predicated region
        $region29: #{_lambda_.2} parent=15 // pred_check
          %p349 = pneg %p156
        $region30: #{_lambda_.2} parent=15 // pred_check_branch
          %351 = sbr.rel (%p349) target = $region32
        $region31: #{_lambda_.2} parent=15 // pred_region
          %s352 = sand.u32 %s33, 1
          %s353 = scalar_lea.sflag [#allocation11], %s352
          %s354 = sand.u32 %s146, 1
          %s355 = smul.addr %s354, 16
          %s356 = scalar_lea.vmem [#allocation10], %s355
          %s358 = ssub.s32 256, 256
          %359 = vsyncadd %s353, %s358
          %s360 = smul.addr %s40, 4
          %s361 = smul.addr %s360, 64
          %s362 = scalar_lea.hbm %s4, %s361
          %s363 = sshll.u32 %s356, 4
          %s364 = int_to_ptr.vmem [resolvable:$true] %s363
          %369 = dma.hbm_to_vmem [thread:$0]  %s362, 256, %s364, %s353, 64, 64, 4
        $region32: #{_lambda_.2} parent=15 // pred_fallthru
          _
        // Predicated region
        $region33: #{_lambda_.2} parent=15 // pred_check
          %p370 = pneg %p182
        $region34: #{_lambda_.2} parent=15 // pred_check_branch
          %372 = sbr.rel (%p370) target = $region36
        $region35: #{_lambda_.2} parent=15 // pred_region
          %s373 = sand.u32 %s33, 1
          %s374 = scalar_lea.sflag [#allocation11], %s373
          %s375 = sand.u32 %s172, 1
          %s376 = scalar_lea.vmem [#allocation12], %s375
          %s378 = ssub.s32 16, 16
          %379 = vsyncadd %s374, %s378
          %s380 = smul.addr %s40, 16
          %s381 = scalar_lea.hbm %s5, %s380
          %s383 = sshll.u32 %s376, 4
          %s384 = int_to_ptr.vmem [resolvable:$true] %s383
          %386 = dma.hbm_to_vmem [thread:$0]  %s381, 16, %s384, %s374
        $region36: #{_lambda_.2} parent=15 // pred_fallthru
          _
        // Predicated region
        $region37: #{_lambda_.2} parent=15 // pred_check
          %p387 = pneg %p208
        $region38: #{_lambda_.2} parent=15 // pred_check_branch
          %389 = sbr.rel (%p387) target = $region40
        $region39: #{_lambda_.2} parent=15 // pred_region
          %s390 = sand.u32 %s33, 1
          %s391 = scalar_lea.sflag [#allocation14], %s390
          %s392 = sand.u32 %s198, 1
          %s393 = smul.addr %s392, 64
          %s394 = scalar_lea.vmem [#allocation13], %s393
          %s396 = ssub.s32 1024, 1024
          %397 = vsyncadd %s391, %s396
          %s398 = smul.addr %s40, 16
          %s399 = smul.addr %s398, 64
          %s400 = scalar_lea.hbm %s6, %s399
          %s401 = sshll.u32 %s394, 4
          %s402 = int_to_ptr.vmem [resolvable:$true] %s401
          %407 = dma.hbm_to_vmem [thread:$0]  %s400, 1024, %s402, %s391, 256, 256, 16
        $region40: #{_lambda_.2} parent=15 // pred_fallthru
          _
        // Predicated region
        $region41: #{_lambda_.2} parent=15 // pred_check
          %p408 = pneg %p234
        $region42: #{_lambda_.2} parent=15 // pred_check_branch
          %410 = sbr.rel (%p408) target = $region44
        $region43: #{_lambda_.2} parent=15 // pred_region
          %s411 = sand.u32 %s33, 1
          %s412 = scalar_lea.sflag [#allocation14], %s411
          %s413 = sand.u32 %s224, 1
          %s414 = smul.addr %s413, 4
          %s415 = scalar_lea.vmem [#allocation15], %s414
          %s417 = ssub.s32 64, 64
          %418 = vsyncadd %s412, %s417
          %s419 = smul.addr %s40, 4
          %s420 = smul.addr %s419, 16
          %s421 = scalar_lea.hbm %s7, %s420
          %s423 = sshll.u32 %s415, 4
          %s424 = int_to_ptr.vmem [resolvable:$true] %s423
          %426 = dma.hbm_to_vmem [thread:$0]  %s421, 64, %s424, %s412
        $region44: #{_lambda_.2} parent=15 // pred_fallthru
          _
      $region16: #{_lambda_.2} parent=5 // pred_fallthru
        _
      %p427 = scmp.le.s32.totalorder 1, %s33
      %p428 = scmp.lt.s32.totalorder %s33, 7
      %p429 = pnand %p427, %p428
      %p430 = pneg %p429
      // Predicated region
      $region45: #{_lambda_.2} parent=5 // pred_check
        _
      $region46: #{_lambda_.2} parent=5 // pred_check_branch
        %432 = sbr.rel (%p429) target = $region48
      $region47: #{_lambda_.2} parent=5 // pred_region
        %s433 = ssub.s32 %s33, 1
        %s434 = sand.u32 %s71, 1
        %s435 = scalar_lea.sflag [#allocation5], %s434
        %s436 = sand.u32 %s71, 1
        %s437 = smul.addr %s436, 16
        %s438 = scalar_lea.vmem [#allocation4], %s437
        // Predicated region
        $region49: #{_lambda_.2} parent=47 // pred_check
          %p439 = pneg %p84
        $region50: #{_lambda_.2} parent=47 // pred_check_branch
          %441 = sbr.rel (%p439) target = $region52
        $region51: #{_lambda_.2} parent=47 // pred_region
          %442 = dma.done %s435, 256
        $region52: #{_lambda_.2} parent=47 // pred_fallthru
          _
        %s443 = sand.u32 %s38, 1
        %s444 = scalar_lea.sflag [#allocation8], %s443
        %s445 = sand.u32 %s97, 1
        %s446 = scalar_lea.vmem [#allocation7], %s445
        // Predicated region
        $region53: #{_lambda_.2} parent=47 // pred_check
          %p447 = pneg %p110
        $region54: #{_lambda_.2} parent=47 // pred_check_branch
          %449 = sbr.rel (%p447) target = $region56
        $region55: #{_lambda_.2} parent=47 // pred_region
          %450 = dma.done %s444, 16
        $region56: #{_lambda_.2} parent=47 // pred_fallthru
          _
        %s451 = sand.u32 %s38, 1
        %s452 = scalar_lea.sflag [#allocation8], %s451
        %s453 = sand.u32 %s123, 1
        %s454 = scalar_lea.vmem [#allocation9], %s453
        // Predicated region
        $region57: #{_lambda_.2} parent=47 // pred_check
          %p455 = pneg %p136
        $region58: #{_lambda_.2} parent=47 // pred_check_branch
          %457 = sbr.rel (%p455) target = $region60
        $region59: #{_lambda_.2} parent=47 // pred_region
          %458 = dma.done %s452, 16
        $region60: #{_lambda_.2} parent=47 // pred_fallthru
          _
        %s459 = sand.u32 %s38, 1
        %s460 = scalar_lea.sflag [#allocation11], %s459
        %s461 = sand.u32 %s149, 1
        %s462 = smul.addr %s461, 16
        %s463 = scalar_lea.vmem [#allocation10], %s462
        // Predicated region
        $region61: #{_lambda_.2} parent=47 // pred_check
          %p464 = pneg %p162
        $region62: #{_lambda_.2} parent=47 // pred_check_branch
          %466 = sbr.rel (%p464) target = $region64
        $region63: #{_lambda_.2} parent=47 // pred_region
          %467 = dma.done %s460, 256
        $region64: #{_lambda_.2} parent=47 // pred_fallthru
          _
        %s468 = sand.u32 %s38, 1
        %s469 = scalar_lea.sflag [#allocation11], %s468
        %s470 = sand.u32 %s175, 1
        %s471 = scalar_lea.vmem [#allocation12], %s470
        // Predicated region
        $region65: #{_lambda_.2} parent=47 // pred_check
          %p472 = pneg %p188
        $region66: #{_lambda_.2} parent=47 // pred_check_branch
          %474 = sbr.rel (%p472) target = $region68
        $region67: #{_lambda_.2} parent=47 // pred_region
          %475 = dma.done %s469, 16
        $region68: #{_lambda_.2} parent=47 // pred_fallthru
          _
        %s476 = sand.u32 %s38, 1
        %s477 = scalar_lea.sflag [#allocation14], %s476
        %s478 = sand.u32 %s201, 1
        %s479 = smul.addr %s478, 64
        %s480 = scalar_lea.vmem [#allocation13], %s479
        // Predicated region
        $region69: #{_lambda_.2} parent=47 // pred_check
          %p481 = pneg %p214
        $region70: #{_lambda_.2} parent=47 // pred_check_branch
          %483 = sbr.rel (%p481) target = $region72
        $region71: #{_lambda_.2} parent=47 // pred_region
          %484 = dma.done %s477, 1024
        $region72: #{_lambda_.2} parent=47 // pred_fallthru
          _
        %s485 = sand.u32 %s38, 1
        %s486 = scalar_lea.sflag [#allocation14], %s485
        %s487 = sand.u32 %s227, 1
        %s488 = smul.addr %s487, 4
        %s489 = scalar_lea.vmem [#allocation15], %s488
        // Predicated region
        $region73: #{_lambda_.2} parent=47 // pred_check
          %p490 = pneg %p240
        $region74: #{_lambda_.2} parent=47 // pred_check_branch
          %492 = sbr.rel (%p490) target = $region76
        $region75: #{_lambda_.2} parent=47 // pred_region
          %493 = dma.done %s486, 64
        $region76: #{_lambda_.2} parent=47 // pred_fallthru
          _
        %s494 = sand.u32 %s71, 1
        %s495 = scalar_lea.sflag [#allocation5], %s494
        %s496 = sand.u32 %s71, 1
        %s497 = smul.addr %s496, 16
        %s498 = scalar_lea.vmem [#allocation4], %s497
        %p499 = pneg %p84
        %p500 = pneg %p81
        %s501 = sand.u32 %s38, 1
        %s502 = scalar_lea.sflag [#allocation8], %s501
        %s503 = sand.u32 %s97, 1
        %s504 = scalar_lea.vmem [#allocation7], %s503
        %p505 = pneg %p110
        %p506 = pneg %p107
        %s507 = sand.u32 %s38, 1
        %s508 = scalar_lea.sflag [#allocation8], %s507
        %s509 = sand.u32 %s123, 1
        %s510 = scalar_lea.vmem [#allocation9], %s509
        %p511 = pneg %p136
        %p512 = pneg %p133
        %s513 = sand.u32 %s38, 1
        %s514 = scalar_lea.sflag [#allocation11], %s513
        %s515 = sand.u32 %s149, 1
        %s516 = smul.addr %s515, 16
        %s517 = scalar_lea.vmem [#allocation10], %s516
        %p518 = pneg %p162
        %p519 = pneg %p159
        %s520 = sand.u32 %s38, 1
        %s521 = scalar_lea.sflag [#allocation11], %s520
        %s522 = sand.u32 %s175, 1
        %s523 = scalar_lea.vmem [#allocation12], %s522
        %p524 = pneg %p188
        %p525 = pneg %p185
        %s526 = sand.u32 %s38, 1
        %s527 = scalar_lea.sflag [#allocation14], %s526
        %s528 = sand.u32 %s201, 1
        %s529 = smul.addr %s528, 64
        %s530 = scalar_lea.vmem [#allocation13], %s529
        %p531 = pneg %p214
        %p532 = pneg %p211
        %s533 = sand.u32 %s38, 1
        %s534 = scalar_lea.sflag [#allocation14], %s533
        %s535 = sand.u32 %s227, 1
        %s536 = smul.addr %s535, 4
        %s537 = scalar_lea.vmem [#allocation15], %s536
        %p538 = pneg %p240
        %p539 = pneg %p237
        %p540 = pneg %p270
        %p541 = pneg %p267
        %s542 = sand.u32 %s257, 1
        %s543 = scalar_lea.sflag [#allocation6], %s542
        %s544 = sand.u32 %s257, 1
        %s545 = smul.addr %s544, 32
        %s546 = scalar_lea.vmem [#allocation16], %s545
        %s547 = sld [smem:[#allocation3 + %s43]]
        %s548 = smul.u32 2, %s45
        %s549 = smul.u32 2, %s45
        %v551 = vld [vmem:[%s438] sm:$0xff]
        %v552 = vld [vmem:[%s438 + $0x8] sm:$0xff]
        %vm553 = vcmask 261120
        %v554 = vsel %vm553, %v551, 0.0
        %555 = vadd.xlane.f32.xlu0 %v554
        %v556 = vpop.xlane.xlu0 %555
        %v557 = vsel %vm553, %v552, 0.0
        %558 = vadd.xlane.f32.xlu0 %v557
        %v559 = vpop.xlane.xlu0 %558
        %v560 = vrcp.pop 32.0
        %v561 = vmul.f32 %v556, %v560
        %v562 = vmul.f32 %v559, %v560
        %v563 = vsub.f32 %v551, %v561
        %v564 = vsub.f32 %v552, %v562
        %v565 = vmul.f32 %v563, %v563
        %v566 = vmul.f32 %v564, %v564
        %v567 = vsel %vm553, %v565, 0.0
        %568 = vadd.xlane.f32.xlu0 %v567
        %v569 = vpop.xlane.xlu0 %568
        %v570 = vsel %vm553, %v566, 0.0
        %571 = vadd.xlane.f32.xlu0 %v570
        %v572 = vpop.xlane.xlu0 %571
        %v573 = vmul.f32 %v569, %v560
        %v574 = vmul.f32 %v572, %v560
        %v575 = vadd.f32 %v573, 1e-05
        %v576 = vadd.f32 %v574, 1e-05
        %v577 = vrsqrt.pop %v575
        %v578 = vrsqrt.pop %v576
        %v579 = vmul.f32 %v563, %v577
        %v580 = vmul.f32 %v564, %v578
        %v581 = vld [vmem:[%s446] sm:$0x1]
        %v583 = vlaneseq
        %v584 = vshrl.u32 %v583, 7
        %v585 = vsub.s32 0, %v584
        %v586 = vrot.slane %v581, %v585
        %v588 = vmul.f32 %v579, %v586
        %v589 = vmul.f32 %v580, %v586
        %v590 = vld [vmem:[%s454] sm:$0x1]
        %v592 = vlaneseq
        %v593 = vshrl.u32 %v592, 7
        %v594 = vsub.s32 0, %v593
        %v595 = vrot.slane %v590, %v594
        %v597 = vadd.f32 %v588, %v595
        %v598 = vadd.f32 %v589, %v595
        %v599 = vpack.c.bf16 %v598, %v597
        %v600 = vld [vmem:[%s463] sm:$0xf]
        %v601 = vld [vmem:[%s463 + $0x4] sm:$0xf]
        %v602 = vld [vmem:[%s463 + $0x8] sm:$0xf]
        %v603 = vld [vmem:[%s463 + $0xc] sm:$0xf]
        %v604 = vld [vmem:[%s471] sm:$0x1]
        %v606 = vlaneseq
        %v607 = vshrl.u32 %v606, 7
        %v608 = vsub.s32 0, %v607
        %v609 = vrot.slane %v604, %v608
        %v615 = vunpack.c.l.b16 %v600
        %v616 = vunpack.c.l.b16 %v601
        %v617 = vunpack.c.l.b16 %v602
        %v618 = vunpack.c.l.b16 %v603
        %v619 = vpack.c.b16 %v616, %v615
        %v620 = vpack.c.b16 %v618, %v617
        %v624 = vsel %vm553, %v599, 0
        %626 = vmatprep.subr.bf16.mxu0 0
        %627 = vmatpush1.bf16.msra.mxu0 %v619
        %628 = vmatprep.subr.bf16.mxu0 0
        %629 = vmatpush1.bf16.msra.mxu0 %v620
        %630 = vmatprep.subr.bf16.mxu0 0
        %631 = vmatpush1.bf16.msra.mxu0 0
        %632 = vmatprep.subr.bf16.mxu0 0
        %633 = vmatpush1.bf16.msra.mxu0 0
        %634 = vmatprep.subr.bf16.mxu0 0
        %635 = vmatpush1.bf16.msra.mxu0 0
        %636 = vmatprep.subr.bf16.mxu0 0
        %637 = vmatpush1.bf16.msra.mxu0 0
        %638 = vmatprep.subr.bf16.mxu0 0
        %639 = vmatpush1.bf16.msra.mxu0 0
        %640 = vmatprep.subr.bf16.mxu0 0
        %641 = vmatpush1.bf16.msra.mxu0 0
        %642 = vmatprep.subr.bf16.mxu0 0
        %643 = vmatpush1.bf16.msra.mxu0 0
        %644 = vmatprep.subr.bf16.mxu0 0
        %645 = vmatpush1.bf16.msra.mxu0 0
        %646 = vmatprep.subr.bf16.mxu0 0
        %647 = vmatpush1.bf16.msra.mxu0 0
        %648 = vmatprep.subr.bf16.mxu0 0
        %649 = vmatpush1.bf16.msra.mxu0 0
        %650 = vmatprep.subr.bf16.mxu0 0
        %651 = vmatpush1.bf16.msra.mxu0 0
        %652 = vmatprep.subr.bf16.mxu0 0
        %653 = vmatpush1.bf16.msra.mxu0 0
        %654 = vmatprep.subr.bf16.mxu0 0
        %655 = vmatpush1.bf16.msra.mxu0 0
        %656 = vmatprep.subr.bf16.mxu0 0
        %657 = vmatpush1.bf16.msra.mxu0 0
        %658 = vmatprep.mubr.bf16.mxu0 0
        %659 = vmatmul.mubr.bf16.gmra.mrb[0].mxu0 %v624
        %v660 = vpop.f32.mrb[0].mxu0
        %v661 = vadd.f32 %v609, %v660
        %v662 = vpop.f32.mrb[0].mxu0
        %v663 = vpop.f32.mrb[0].mxu0
        %v664 = vadd.f32 %v609, %v663
        %v665 = vpop.f32.mrb[0].mxu0
        %666 = vdwg.mxu0
        %v667 = vtanh.pop %v661
        %v668 = vtanh.pop %v664
        %v669 = vpack.c.bf16 %v668, %v667
        %v670 = vld [vmem:[%s480] sm:$0xff]
        %v671 = vld [vmem:[%s480 + $0x8] sm:$0xff]
        %v672 = vld [vmem:[%s480 + $0x10] sm:$0xff]
        %v673 = vld [vmem:[%s480 + $0x18] sm:$0xff]
        %v674 = vld [vmem:[%s480 + $0x20] sm:$0xff]
        %v675 = vld [vmem:[%s480 + $0x28] sm:$0xff]
        %v676 = vld [vmem:[%s480 + $0x30] sm:$0xff]
        %v677 = vld [vmem:[%s480 + $0x38] sm:$0xff]
        %v678 = vld [vmem:[%s489] sm:$0xf]
        %v680 = vlaneseq
        %v681 = vshrl.u32 %v680, 7
        %v682 = vsub.s32 0, %v681
        %v683 = vrot.slane %v678, %v682
        %v684 = vlaneseq
        %v685 = vshrl.u32 %v684, 7
        %v686 = vsub.s32 1, %v685
        %v687 = vrot.slane %v678, %v686
        %v688 = vlaneseq
        %v689 = vshrl.u32 %v688, 7
        %v690 = vsub.s32 2, %v689
        %v691 = vrot.slane %v678, %v690
        %v692 = vlaneseq
        %v693 = vshrl.u32 %v692, 7
        %v694 = vsub.s32 3, %v693
        %v695 = vrot.slane %v678, %v694
        %v708 = vunpack.c.l.b16 %v670
        %v709 = vunpack.c.h.b16 %v670
        %v710 = vunpack.c.l.b16 %v671
        %v711 = vunpack.c.h.b16 %v671
        %v712 = vunpack.c.l.b16 %v672
        %v713 = vunpack.c.h.b16 %v672
        %v714 = vunpack.c.l.b16 %v673
        %v715 = vunpack.c.h.b16 %v673
        %v716 = vunpack.c.l.b16 %v674
        %v717 = vunpack.c.h.b16 %v674
        %v718 = vunpack.c.l.b16 %v675
        %v719 = vunpack.c.h.b16 %v675
        %v720 = vunpack.c.l.b16 %v676
        %v721 = vunpack.c.h.b16 %v676
        %v722 = vunpack.c.l.b16 %v677
        %v723 = vunpack.c.h.b16 %v677
        %v724 = vpack.c.b16 %v712, %v708
        %v725 = vpack.c.b16 %v713, %v709
        %v726 = vpack.c.b16 %v714, %v710
        %v727 = vpack.c.b16 %v715, %v711
        %v728 = vpack.c.b16 %v720, %v716
        %v729 = vpack.c.b16 %v721, %v717
        %v730 = vpack.c.b16 %v722, %v718
        %v731 = vpack.c.b16 %v723, %v719
        %v741 = vsel %vm553, %v669, 0
        %743 = vmatprep.subr.bf16.mxu0 %v725
        %744 = vmatpush1.bf16.msra.mxu0 %v724
        %745 = vmatprep.subr.bf16.mxu0 %v729
        %746 = vmatpush1.bf16.msra.mxu0 %v728
        %747 = vmatprep.subr.bf16.mxu0 0
        %748 = vmatpush1.bf16.msra.mxu0 0
        %749 = vmatprep.subr.bf16.mxu0 0
        %750 = vmatpush1.bf16.msra.mxu0 0
        %751 = vmatprep.subr.bf16.mxu0 0
        %752 = vmatpush1.bf16.msra.mxu0 0
        %753 = vmatprep.subr.bf16.mxu0 0
        %754 = vmatpush1.bf16.msra.mxu0 0
        %755 = vmatprep.subr.bf16.mxu0 0
        %756 = vmatpush1.bf16.msra.mxu0 0
        %757 = vmatprep.subr.bf16.mxu0 0
        %758 = vmatpush1.bf16.msra.mxu0 0
        %759 = vmatprep.subr.bf16.mxu0 0
        %760 = vmatpush1.bf16.msra.mxu0 0
        %761 = vmatprep.subr.bf16.mxu0 0
        %762 = vmatpush1.bf16.msra.mxu0 0
        %763 = vmatprep.subr.bf16.mxu0 0
        %764 = vmatpush1.bf16.msra.mxu0 0
        %765 = vmatprep.subr.bf16.mxu0 0
        %766 = vmatpush1.bf16.msra.mxu0 0
        %767 = vmatprep.subr.bf16.mxu0 0
        %768 = vmatpush1.bf16.msra.mxu0 0
        %769 = vmatprep.subr.bf16.mxu0 0
        %770 = vmatpush1.bf16.msra.mxu0 0
        %771 = vmatprep.subr.bf16.mxu0 0
        %772 = vmatpush1.bf16.msra.mxu0 0
        %773 = vmatprep.subr.bf16.mxu0 0
        %774 = vmatpush1.bf16.msra.mxu0 0
        %775 = vmatprep.mubr.bf16.mxu0 0
        %776 = vmatmul.mubr.bf16.gmra.mrb[0].mxu0 %v741
        %v777 = vpop.f32.mrb[0].mxu0
        %v778 = vadd.f32 %v683, %v777
        %v779 = vpop.f32.mrb[0].mxu0
        %v780 = vadd.f32 %v687, %v779
        %v781 = vpop.f32.mrb[0].mxu0
        %v782 = vadd.f32 %v683, %v781
        %v783 = vpop.f32.mrb[0].mxu0
        %v784 = vadd.f32 %v687, %v783
        %785 = vdwg.mxu0
        %786 = vmatprep.subr.bf16.mxu0 %v727
        %787 = vmatpush1.bf16.msra.mxu0 %v726
        %788 = vmatprep.subr.bf16.mxu0 %v731
        %789 = vmatpush1.bf16.msra.mxu0 %v730
        %790 = vmatprep.subr.bf16.mxu0 0
        %791 = vmatpush1.bf16.msra.mxu0 0
        %792 = vmatprep.subr.bf16.mxu0 0
        %793 = vmatpush1.bf16.msra.mxu0 0
        %794 = vmatprep.subr.bf16.mxu0 0
        %795 = vmatpush1.bf16.msra.mxu0 0
        %796 = vmatprep.subr.bf16.mxu0 0
        %797 = vmatpush1.bf16.msra.mxu0 0
        %798 = vmatprep.subr.bf16.mxu0 0
        %799 = vmatpush1.bf16.msra.mxu0 0
        %800 = vmatprep.subr.bf16.mxu0 0
        %801 = vmatpush1.bf16.msra.mxu0 0
        %802 = vmatprep.subr.bf16.mxu0 0
        %803 = vmatpush1.bf16.msra.mxu0 0
        %804 = vmatprep.subr.bf16.mxu0 0
        %805 = vmatpush1.bf16.msra.mxu0 0
        %806 = vmatprep.subr.bf16.mxu0 0
        %807 = vmatpush1.bf16.msra.mxu0 0
        %808 = vmatprep.subr.bf16.mxu0 0
        %809 = vmatpush1.bf16.msra.mxu0 0
        %810 = vmatprep.subr.bf16.mxu0 0
        %811 = vmatpush1.bf16.msra.mxu0 0
        %812 = vmatprep.subr.bf16.mxu0 0
        %813 = vmatpush1.bf16.msra.mxu0 0
        %814 = vmatprep.subr.bf16.mxu0 0
        %815 = vmatpush1.bf16.msra.mxu0 0
        %816 = vmatprep.subr.bf16.mxu0 0
        %817 = vmatpush1.bf16.msra.mxu0 0
        %818 = vmatprep.mubr.bf16.mxu0 0
        %819 = vmatmul.mubr.bf16.gmra.mrb[0].mxu0 %v741
        %v820 = vpop.f32.mrb[0].mxu0
        %v821 = vadd.f32 %v691, %v820
        %v822 = vpop.f32.mrb[0].mxu0
        %v823 = vadd.f32 %v695, %v822
        %v824 = vpop.f32.mrb[0].mxu0
        %v825 = vadd.f32 %v691, %v824
        %v826 = vpop.f32.mrb[0].mxu0
        %v827 = vadd.f32 %v695, %v826
        %828 = vdwg.mxu0
        %v829 = vxor.u32 %v821, 2147483648
        %v830 = vxor.u32 %v823, 2147483648
        %v831 = vxor.u32 %v825, 2147483648
        %v832 = vxor.u32 %v827, 2147483648
        %v833 = vmul.f32 %v829, 1.442695
        %v834 = vpow.pop %v833
        %v835 = vmul.f32 %v830, 1.442695
        %v836 = vpow.pop %v835
        %v837 = vmul.f32 %v831, 1.442695
        %v838 = vpow.pop %v837
        %v839 = vmul.f32 %v832, 1.442695
        %v840 = vpow.pop %v839
        %v841 = vadd.f32 %v834, 1.0
        %v842 = vadd.f32 %v836, 1.0
        %v843 = vadd.f32 %v838, 1.0
        %v844 = vadd.f32 %v840, 1.0
        %v845 = vrcp.pop %v841
        %v846 = vmul.f32 1.0, %v845
        %v847 = vrcp.pop %v842
        %v848 = vmul.f32 1.0, %v847
        %v849 = vrcp.pop %v843
        %v850 = vmul.f32 1.0, %v849
        %v851 = vrcp.pop %v844
        %v852 = vmul.f32 1.0, %v851
        %v853 = vmul.f32 %v778, %v846
        %v854 = vmul.f32 %v780, %v848
        %v855 = vmul.f32 %v782, %v850
        %v856 = vmul.f32 %v784, %v852
        %857 = vst [vmem:[%s546] sm:$0xff] %v853
        %858 = vst [vmem:[%s546 + $0x8] sm:$0xff] %v854
        %859 = vst [vmem:[%s546 + $0x10] sm:$0xff] %v855
        %860 = vst [vmem:[%s546 + $0x18] sm:$0xff] %v856
        %s861 = sand.u32 %s257, 1
        %s862 = scalar_lea.sflag [#allocation6], %s861
        %s863 = sand.u32 %s257, 1
        %s864 = smul.addr %s863, 32
        %s865 = scalar_lea.vmem [#allocation16], %s864
        // Predicated region
        $region77: #{_lambda_.2} parent=47 // pred_check
          %p866 = pneg %p267
        $region78: #{_lambda_.2} parent=47 // pred_check_branch
          %868 = sbr.rel (%p866) target = $region80
        $region79: #{_lambda_.2} parent=47 // pred_region
          %s869 = smul.u32 2, %s45
          %s871 = ssub.s32 512, 512
          %872 = vsyncadd %s862, %s871
          %s873 = smul.addr %s869, 2
          %s874 = smul.addr %s44, 4
          %s875 = sadd.s32 %s873, %s874
          %s876 = smul.addr %s43, 8
          %s877 = sadd.s32 %s875, %s876
          %s878 = smul.addr %s877, 128
          %s879 = scalar_lea.hbm %s8, %s878
          %s880 = sshll.u32 %s865, 4
          %s881 = int_to_ptr.vmem [resolvable:$true] %s880
          %886 = dma.vmem_to_hbm [thread:$0]  %s881, 512, %s879, %s862, 256, 256, 16
        $region80: #{_lambda_.2} parent=47 // pred_fallthru
          _
      $region48: #{_lambda_.2} parent=5 // pred_fallthru
        _
      %p887 = scmp.le.s32.totalorder 2, %s33
      // Predicated region
      $region81: #{_lambda_.2} parent=5 // pred_check
        %p888 = pneg %p887
      $region82: #{_lambda_.2} parent=5 // pred_check_branch
        %890 = sbr.rel (%p888) target = $region84
      $region83: #{_lambda_.2} parent=5 // pred_region
        %s891 = ssub.s32 %s33, 2
        // Predicated region
        $region85: #{_lambda_.2} parent=83 // pred_check
          %p892 = pneg %p273
        $region86: #{_lambda_.2} parent=83 // pred_check_branch
          %894 = sbr.rel (%p892) target = $region88
        $region87: #{_lambda_.2} parent=83 // pred_region
          %s895 = sand.u32 %s258, 1
          %s896 = scalar_lea.sflag [#allocation6], %s895
          %s897 = sand.u32 %s258, 1
          %s898 = smul.addr %s897, 32
          %s899 = scalar_lea.vmem [#allocation16], %s898
          %900 = dma.done %s896, 512
        $region88: #{_lambda_.2} parent=83 // pred_fallthru
          _
      $region84: #{_lambda_.2} parent=5 // pred_fallthru
        _
    $region6: #{_lambda_.2} parent=1 // loop_footer
      %s37 = sadd.s32 1, %s33
    $region7: #{_lambda_.2} parent=1 // loop_footer_branch
      %32 = sbr.rel target = $region3
    $region8: #{_lambda_.2} parent=1 // loop_exit
      _
    %901 = vsyncpa [#allocation5], 1
    %s902 = scalar_lea.sflag [#allocation5], 1
    %903 = vsyncpa %s902, 1
    %904 = vsyncpa [#allocation8], 1
    %s905 = scalar_lea.sflag [#allocation8], 1
    %906 = vsyncpa %s905, 1
    %907 = vsyncpa [#allocation11], 1
    %s908 = scalar_lea.sflag [#allocation11], 1
    %909 = vsyncpa %s908, 1
    %910 = vsyncpa [#allocation14], 1
    %s911 = scalar_lea.sflag [#allocation14], 1
    %912 = vsyncpa %s911, 1
    %913 = vsyncpa [#allocation6], 1
    %s914 = scalar_lea.sflag [#allocation6], 1
    %915 = vsyncpa %s914, 1

// kernel: _lambda_.3
$region0: #{_lambda_.3}
  #allocation0 [shape = 'u32[]', space=smem, size = 0x4, offset = 0x4, fixed_abs, tag = 'smem constant byte address 0x4 - core index']
  #allocation1 [shape = 'u32[144,128]{1,0:T(1,128)}', space=vmem, size = 0x12000, scoped, tag = 'internal scratch']
  #allocation2 [shape = 's32[1]{0}', space=sflag, size = 0x4, scoped, tag = 'scoped memory for _lambda_.3']
  #allocation3 [shape = 's32[1]{0:T(128)S(6)}', space=smem, size = 0x200, scoped, tag = 'prefetched SMEM operand 0']
  %s0 = inlined_call_operand.<no memory space> [shape: s32[1], index: 0, kind: input, shape index: {}]
  %s1 = inlined_call_operand.hbm [shape: f32[2,4,16,32], index: 1, kind: input, shape index: {}]
  %s2 = inlined_call_operand.hbm [shape: f32[1,1,32], index: 2, kind: input, shape index: {}]
  %s3 = inlined_call_operand.hbm [shape: f32[1,1,32], index: 3, kind: input, shape index: {}]
  %s4 = inlined_call_operand.hbm [shape: bf16[1,32,32], index: 4, kind: input, shape index: {}]
  %s5 = inlined_call_operand.hbm [shape: f32[1,1,32], index: 5, kind: input, shape index: {}]
  %s6 = inlined_call_operand.hbm [shape: bf16[1,32,1024], index: 6, kind: input, shape index: {}]
  %s7 = inlined_call_operand.hbm [shape: f32[1,1,1024], index: 7, kind: input, shape index: {}]
  %s8 = inlined_call_operand.hbm [shape: f32[1,2,16,512], index: 8, kind: output, shape index: {}]
  %s9 = sld [smem:[#allocation0]]
  $region89: #{_lambda_.3} parent=0
    _
  %s11 = ssub.s32 1, %s9
  %s12 = scalar_select 0, %s11, %s9
  %13 = sst [smem:[#allocation3]] %s0
  $region1: #{_lambda_.3} parent=0
    #allocation4 [shape = 'u8[16384]{0}', space=vmem, size = 0x4000, scoped, tag = 'input window, operand 1']
    #allocation5 [shape = 's32[2]{0}', space=sflag, size = 0x8, scoped, tag = 'scoped memory for _lambda_.3']
    #allocation6 [shape = 's32[2]{0}', space=sflag, size = 0x8, scoped, tag = 'scoped memory for _lambda_.3']
    #allocation7 [shape = 'u8[512]{0}', space=vmem, size = 0x400, scoped, tag = 'input window, operand 2, single buffered']
    #allocation8 [shape = 's32[1]{0}', space=sflag, size = 0x4, scoped, tag = 'scoped memory for _lambda_.3']
    #allocation9 [shape = 'u8[512]{0}', space=vmem, size = 0x400, scoped, tag = 'input window, operand 3, single buffered']
    #allocation10 [shape = 'u8[8192]{0}', space=vmem, size = 0x2000, scoped, tag = 'input window, operand 4, single buffered']
    #allocation11 [shape = 's32[1]{0}', space=sflag, size = 0x4, scoped, tag = 'scoped memory for _lambda_.3']
    #allocation12 [shape = 'u8[512]{0}', space=vmem, size = 0x400, scoped, tag = 'input window, operand 5, single buffered']
    #allocation13 [shape = 'u8[65536]{0}', space=vmem, size = 0x10000, scoped, tag = 'input window, operand 6, single buffered']
    #allocation14 [shape = 's32[1]{0}', space=sflag, size = 0x4, scoped, tag = 'scoped memory for _lambda_.3']
    #allocation15 [shape = 'u8[4096]{0}', space=vmem, size = 0x1000, scoped, tag = 'input window, operand 7, single buffered']
    #allocation16 [shape = 'u8[65536]{0}', space=vmem, size = 0x10000, scoped, tag = 'output window, operand 0']
    %14 = vsyncpa [#allocation5], 0
    %s15 = scalar_lea.sflag [#allocation5], 1
    %16 = vsyncpa %s15, 0
    %17 = vsyncpa [#allocation8], 0
    %18 = vsyncpa [#allocation11], 0
    %19 = vsyncpa [#allocation14], 0
    %20 = vsyncpa [#allocation6], 0
    %s21 = scalar_lea.sflag [#allocation6], 1
    %22 = vsyncpa %s21, 0
    loop: start=0, step=1, limit=4
    $region2: #{_lambda_.3} parent=1 // loop_pre_header
      _
    $region3: #{_lambda_.3} parent=1 // loop_header
      %s24 = sphi 0, %s28
      %p25 = scmp.ge.s32.totalorder %s24, 4
      %s31 = sphi 0, %s50
      %s32 = sphi 0, %s46
      %s33 = sphi 0, %s42
      %s34 = sphi 0, %s31
      %s35 = sphi 0, %s32
      %s36 = sphi 0, %s33
      %s37 = sphi 0, %s34
      %s38 = sphi 0, %s35
      %s39 = sphi 0, %s36
      %s59 = sphi 0, %s61
      %s62 = sphi 0, %s59
      %s63 = sphi 0, %s62
      %s79 = sphi 0, %s63
      %s85 = sphi 0, %s87
      %s88 = sphi 0, %s85
      %s89 = sphi 0, %s88
      %s105 = sphi 0, %s89
      %s111 = sphi 0, %s113
      %s114 = sphi 0, %s111
      %s115 = sphi 0, %s114
      %s131 = sphi 0, %s115
      %s137 = sphi 0, %s139
      %s140 = sphi 0, %s137
      %s141 = sphi 0, %s140
      %s157 = sphi 0, %s141
      %s163 = sphi 0, %s165
      %s166 = sphi 0, %s163
      %s167 = sphi 0, %s166
      %s183 = sphi 0, %s167
      %s189 = sphi 0, %s191
      %s192 = sphi 0, %s189
      %s193 = sphi 0, %s192
      %s209 = sphi 0, %s193
      %s215 = sphi 0, %s217
      %s218 = sphi 0, %s215
      %s219 = sphi 0, %s218
      %s235 = sphi 0, %s219
      %s245 = sphi 0, %s247
      %s248 = sphi 0, %s245
      %s249 = sphi 0, %s248
      %s265 = sphi 0, %s249
    $region4: #{_lambda_.3} parent=1 // loop_header_branch
      %27 = sbr.rel (%p25) target = $region8
    $region5: #{_lambda_.3} parent=1 // loop_body
      %s29 = ssub.s32 %s24, 1
      %s30 = ssub.s32 %s24, 2
      %s40 = sadd.s32 1, %s33
      %p41 = scmp.ge.s32.totalorder %s40, 1
      %s42 = scalar_select %p41, 0, %s40
      %s43 = sadd.s32 1, %s32
      %s44 = scalar_select %p41, %s43, %s32
      %p45 = scmp.ge.s32.totalorder %s44, 2
      %s46 = scalar_select %p45, 0, %s44
      %s47 = sadd.s32 1, %s31
      %s48 = scalar_select %p45, %s47, %s31
      %p49 = scmp.ge.s32.totalorder %s48, 1
      %s50 = scalar_select %p49, 0, %s48
      %s51 = sld [smem:[#allocation3 + %s31]]
      %s52 = sld [smem:[#allocation3 + %s50]]
      %s53 = ssub.s32 %s32, %s46
      %s54 = ssub.s32 %s51, %s52
      %s55 = sor.u32 %s53, %s54
      %s56 = ssub.s32 %s33, %s42
      %s57 = sor.u32 %s55, %s56
      %p58 = scmp.eq.s32.totalorder %s57, 0
      %s60 = sadd.s32 %s59, 1
      %s61 = scalar_select %p58, %s59, %s60
      %p64 = pneg %p58
      %p65 = scmp.eq.s32.totalorder %s24, 1
      %p66 = por %p64, %p65
      %p67 = scmp.ne.s32.totalorder %s59, %s62
      %p68 = scmp.eq.s32.totalorder %s24, 0
      %p69 = por %p67, %p68
      %p70 = scmp.ne.s32.totalorder %s59, %s62
      %p71 = scmp.eq.s32.totalorder %s29, 1
      %p72 = por %p70, %p71
      %p73 = scmp.ne.s32.totalorder %s62, %s63
      %p74 = scmp.eq.s32.totalorder %s29, 0
      %p75 = por %p73, %p74
      %p76 = scmp.ne.s32.totalorder %s62, %s63
      %p77 = scmp.eq.s32.totalorder %s30, 1
      %p78 = por %p76, %p77
      %p80 = scmp.ne.s32.totalorder %s63, %s79
      %p81 = scmp.eq.s32.totalorder %s30, 0
      %p82 = por %p80, %p81
      %s83 = ssub.s32 %s31, %s50
      %p84 = scmp.eq.s32.totalorder %s83, 0
      %s86 = sadd.s32 %s85, 1
      %s87 = scalar_select %p84, %s85, %s86
      %p90 = pneg %p84
      %p91 = scmp.eq.s32.totalorder %s24, 1
      %p92 = por %p90, %p91
      %p93 = scmp.ne.s32.totalorder %s85, %s88
      %p94 = scmp.eq.s32.totalorder %s24, 0
      %p95 = por %p93, %p94
      %p96 = scmp.ne.s32.totalorder %s85, %s88
      %p97 = scmp.eq.s32.totalorder %s29, 1
      %p98 = por %p96, %p97
      %p99 = scmp.ne.s32.totalorder %s88, %s89
      %p100 = scmp.eq.s32.totalorder %s29, 0
      %p101 = por %p99, %p100
      %p102 = scmp.ne.s32.totalorder %s88, %s89
      %p103 = scmp.eq.s32.totalorder %s30, 1
      %p104 = por %p102, %p103
      %p106 = scmp.ne.s32.totalorder %s89, %s105
      %p107 = scmp.eq.s32.totalorder %s30, 0
      %p108 = por %p106, %p107
      %s109 = ssub.s32 %s31, %s50
      %p110 = scmp.eq.s32.totalorder %s109, 0
      %s112 = sadd.s32 %s111, 1
      %s113 = scalar_select %p110, %s111, %s112
      %p116 = pneg %p110
      %p117 = scmp.eq.s32.totalorder %s24, 1
      %p118 = por %p116, %p117
      %p119 = scmp.ne.s32.totalorder %s111, %s114
      %p120 = scmp.eq.s32.totalorder %s24, 0
      %p121 = por %p119, %p120
      %p122 = scmp.ne.s32.totalorder %s111, %s114
      %p123 = scmp.eq.s32.totalorder %s29, 1
      %p124 = por %p122, %p123
      %p125 = scmp.ne.s32.totalorder %s114, %s115
      %p126 = scmp.eq.s32.totalorder %s29, 0
      %p127 = por %p125, %p126
      %p128 = scmp.ne.s32.totalorder %s114, %s115
      %p129 = scmp.eq.s32.totalorder %s30, 1
      %p130 = por %p128, %p129
      %p132 = scmp.ne.s32.totalorder %s115, %s131
      %p133 = scmp.eq.s32.totalorder %s30, 0
      %p134 = por %p132, %p133
      %s135 = ssub.s32 %s31, %s50
      %p136 = scmp.eq.s32.totalorder %s135, 0
      %s138 = sadd.s32 %s137, 1
      %s139 = scalar_select %p136, %s137, %s138
      %p142 = pneg %p136
      %p143 = scmp.eq.s32.totalorder %s24, 1
      %p144 = por %p142, %p143
      %p145 = scmp.ne.s32.totalorder %s137, %s140
      %p146 = scmp.eq.s32.totalorder %s24, 0
      %p147 = por %p145, %p146
      %p148 = scmp.ne.s32.totalorder %s137, %s140
      %p149 = scmp.eq.s32.totalorder %s29, 1
      %p150 = por %p148, %p149
      %p151 = scmp.ne.s32.totalorder %s140, %s141
      %p152 = scmp.eq.s32.totalorder %s29, 0
      %p153 = por %p151, %p152
      %p154 = scmp.ne.s32.totalorder %s140, %s141
      %p155 = scmp.eq.s32.totalorder %s30, 1
      %p156 = por %p154, %p155
      %p158 = scmp.ne.s32.totalorder %s141, %s157
      %p159 = scmp.eq.s32.totalorder %s30, 0
      %p160 = por %p158, %p159
      %s161 = ssub.s32 %s31, %s50
      %p162 = scmp.eq.s32.totalorder %s161, 0
      %s164 = sadd.s32 %s163, 1
      %s165 = scalar_select %p162, %s163, %s164
      %p168 = pneg %p162
      %p169 = scmp.eq.s32.totalorder %s24, 1
      %p170 = por %p168, %p169
      %p171 = scmp.ne.s32.totalorder %s163, %s166
      %p172 = scmp.eq.s32.totalorder %s24, 0
      %p173 = por %p171, %p172
      %p174 = scmp.ne.s32.totalorder %s163, %s166
      %p175 = scmp.eq.s32.totalorder %s29, 1
      %p176 = por %p174, %p175
      %p177 = scmp.ne.s32.totalorder %s166, %s167
      %p178 = scmp.eq.s32.totalorder %s29, 0
      %p179 = por %p177, %p178
      %p180 = scmp.ne.s32.totalorder %s166, %s167
      %p181 = scmp.eq.s32.totalorder %s30, 1
      %p182 = por %p180, %p181
      %p184 = scmp.ne.s32.totalorder %s167, %s183
      %p185 = scmp.eq.s32.totalorder %s30, 0
      %p186 = por %p184, %p185
      %s187 = ssub.s32 %s31, %s50
      %p188 = scmp.eq.s32.totalorder %s187, 0
      %s190 = sadd.s32 %s189, 1
      %s191 = scalar_select %p188, %s189, %s190
      %p194 = pneg %p188
      %p195 = scmp.eq.s32.totalorder %s24, 1
      %p196 = por %p194, %p195
      %p197 = scmp.ne.s32.totalorder %s189, %s192
      %p198 = scmp.eq.s32.totalorder %s24, 0
      %p199 = por %p197, %p198
      %p200 = scmp.ne.s32.totalorder %s189, %s192
      %p201 = scmp.eq.s32.totalorder %s29, 1
      %p202 = por %p200, %p201
      %p203 = scmp.ne.s32.totalorder %s192, %s193
      %p204 = scmp.eq.s32.totalorder %s29, 0
      %p205 = por %p203, %p204
      %p206 = scmp.ne.s32.totalorder %s192, %s193
      %p207 = scmp.eq.s32.totalorder %s30, 1
      %p208 = por %p206, %p207
      %p210 = scmp.ne.s32.totalorder %s193, %s209
      %p211 = scmp.eq.s32.totalorder %s30, 0
      %p212 = por %p210, %p211
      %s213 = ssub.s32 %s31, %s50
      %p214 = scmp.eq.s32.totalorder %s213, 0
      %s216 = sadd.s32 %s215, 1
      %s217 = scalar_select %p214, %s215, %s216
      %p220 = pneg %p214
      %p221 = scmp.eq.s32.totalorder %s24, 1
      %p222 = por %p220, %p221
      %p223 = scmp.ne.s32.totalorder %s215, %s218
      %p224 = scmp.eq.s32.totalorder %s24, 0
      %p225 = por %p223, %p224
      %p226 = scmp.ne.s32.totalorder %s215, %s218
      %p227 = scmp.eq.s32.totalorder %s29, 1
      %p228 = por %p226, %p227
      %p229 = scmp.ne.s32.totalorder %s218, %s219
      %p230 = scmp.eq.s32.totalorder %s29, 0
      %p231 = por %p229, %p230
      %p232 = scmp.ne.s32.totalorder %s218, %s219
      %p233 = scmp.eq.s32.totalorder %s30, 1
      %p234 = por %p232, %p233
      %p236 = scmp.ne.s32.totalorder %s219, %s235
      %p237 = scmp.eq.s32.totalorder %s30, 0
      %p238 = por %p236, %p237
      %s239 = ssub.s32 %s31, %s50
      %s240 = ssub.s32 %s32, %s46
      %s241 = sor.u32 %s239, %s240
      %s242 = ssub.s32 %s33, %s42
      %s243 = sor.u32 %s241, %s242
      %p244 = scmp.eq.s32.totalorder %s243, 0
      %s246 = sadd.s32 %s245, 1
      %s247 = scalar_select %p244, %s245, %s246
      %p250 = pneg %p244
      %p251 = scmp.eq.s32.totalorder %s24, 1
      %p252 = por %p250, %p251
      %p253 = scmp.ne.s32.totalorder %s245, %s248
      %p254 = scmp.eq.s32.totalorder %s24, 0
      %p255 = por %p253, %p254
      %p256 = scmp.ne.s32.totalorder %s245, %s248
      %p257 = scmp.eq.s32.totalorder %s29, 1
      %p258 = por %p256, %p257
      %p259 = scmp.ne.s32.totalorder %s248, %s249
      %p260 = scmp.eq.s32.totalorder %s29, 0
      %p261 = por %p259, %p260
      %p262 = scmp.ne.s32.totalorder %s248, %s249
      %p263 = scmp.eq.s32.totalorder %s30, 1
      %p264 = por %p262, %p263
      %p266 = scmp.ne.s32.totalorder %s249, %s265
      %p267 = scmp.eq.s32.totalorder %s30, 0
      %p268 = por %p266, %p267
      %p269 = scmp.le.s32.totalorder 1, %s24
      %p270 = scmp.lt.s32.totalorder %s24, 3
      %p271 = pnand %p269, %p270
      %p272 = pneg %p271
      // Predicated region
      $region9: #{_lambda_.3} parent=5 // pred_check
        _
      $region10: #{_lambda_.3} parent=5 // pred_check_branch
        %274 = sbr.rel (%p271) target = $region12
      $region11: #{_lambda_.3} parent=5 // pred_region
        %s275 = ssub.s32 %s24, 1
        // Predicated region
        $region13: #{_lambda_.3} parent=11 // pred_check
          %p276 = pneg %p101
        $region14: #{_lambda_.3} parent=11 // pred_check_branch
          %278 = sbr.rel (%p276) target = $region16
        $region15: #{_lambda_.3} parent=11 // pred_region
          %s280 = ssub.s32 16, 16
          %281 = vsyncadd [#allocation8], %s280
          %s282 = smul.addr %s34, 16
          %s283 = scalar_lea.hbm %s2, %s282
          %s285 = sshll.u32 [#allocation7], 4
          %s286 = int_to_ptr.vmem [resolvable:$true] %s285
          %288 = dma.hbm_to_vmem [thread:$0]  %s283, 16, %s286, [#allocation8]
        $region16: #{_lambda_.3} parent=11 // pred_fallthru
          _
        // Predicated region
        $region17: #{_lambda_.3} parent=11 // pred_check
          %p289 = pneg %p127
        $region18: #{_lambda_.3} parent=11 // pred_check_branch
          %291 = sbr.rel (%p289) target = $region20
        $region19: #{_lambda_.3} parent=11 // pred_region
          %s293 = ssub.s32 16, 16
          %294 = vsyncadd [#allocation8], %s293
          %s295 = smul.addr %s34, 16
          %s296 = scalar_lea.hbm %s3, %s295
          %s298 = sshll.u32 [#allocation9], 4
          %s299 = int_to_ptr.vmem [resolvable:$true] %s298
          %301 = dma.hbm_to_vmem [thread:$0]  %s296, 16, %s299, [#allocation8]
        $region20: #{_lambda_.3} parent=11 // pred_fallthru
          _
        // Predicated region
        $region21: #{_lambda_.3} parent=11 // pred_check
          %p302 = pneg %p153
        $region22: #{_lambda_.3} parent=11 // pred_check_branch
          %304 = sbr.rel (%p302) target = $region24
        $region23: #{_lambda_.3} parent=11 // pred_region
          %s306 = ssub.s32 256, 256
          %307 = vsyncadd [#allocation11], %s306
          %s308 = smul.addr %s34, 4
          %s309 = smul.addr %s308, 64
          %s310 = scalar_lea.hbm %s4, %s309
          %s311 = sshll.u32 [#allocation10], 4
          %s312 = int_to_ptr.vmem [resolvable:$true] %s311
          %317 = dma.hbm_to_vmem [thread:$0]  %s310, 256, %s312, [#allocation11], 64, 64, 4
        $region24: #{_lambda_.3} parent=11 // pred_fallthru
          _
        // Predicated region
        $region25: #{_lambda_.3} parent=11 // pred_check
          %p318 = pneg %p179
        $region26: #{_lambda_.3} parent=11 // pred_check_branch
          %320 = sbr.rel (%p318) target = $region28
        $region27: #{_lambda_.3} parent=11 // pred_region
          %s322 = ssub.s32 16, 16
          %323 = vsyncadd [#allocation11], %s322
          %s324 = smul.addr %s34, 16
          %s325 = scalar_lea.hbm %s5, %s324
          %s327 = sshll.u32 [#allocation12], 4
          %s328 = int_to_ptr.vmem [resolvable:$true] %s327
          %330 = dma.hbm_to_vmem [thread:$0]  %s325, 16, %s328, [#allocation11]
        $region28: #{_lambda_.3} parent=11 // pred_fallthru
          _
        // Predicated region
        $region29: #{_lambda_.3} parent=11 // pred_check
          %p331 = pneg %p205
        $region30: #{_lambda_.3} parent=11 // pred_check_branch
          %333 = sbr.rel (%p331) target = $region32
        $region31: #{_lambda_.3} parent=11 // pred_region
          %s335 = ssub.s32 2048, 2048
          %336 = vsyncadd [#allocation14], %s335
          %s337 = smul.addr %s34, 32
          %s338 = smul.addr %s337, 64
          %s339 = scalar_lea.hbm %s6, %s338
          %s340 = sshll.u32 [#allocation13], 4
          %s341 = int_to_ptr.vmem [resolvable:$true] %s340
          %346 = dma.hbm_to_vmem [thread:$0]  %s339, 2048, %s341, [#allocation14], 512, 512, 32
        $region32: #{_lambda_.3} parent=11 // pred_fallthru
          _
        // Predicated region
        $region33: #{_lambda_.3} parent=11 // pred_check
          %p347 = pneg %p231
        $region34: #{_lambda_.3} parent=11 // pred_check_branch
          %349 = sbr.rel (%p347) target = $region36
        $region35: #{_lambda_.3} parent=11 // pred_region
          %s351 = ssub.s32 128, 128
          %352 = vsyncadd [#allocation14], %s351
          %s353 = smul.addr %s34, 8
          %s354 = smul.addr %s353, 16
          %s355 = scalar_lea.hbm %s7, %s354
          %s357 = sshll.u32 [#allocation15], 4
          %s358 = int_to_ptr.vmem [resolvable:$true] %s357
          %360 = dma.hbm_to_vmem [thread:$0]  %s355, 128, %s358, [#allocation14]
        $region36: #{_lambda_.3} parent=11 // pred_fallthru
          _
      $region12: #{_lambda_.3} parent=5 // pred_fallthru
        _
      %p361 = scmp.lt.s32.totalorder %s24, 2
      // Predicated region
      $region37: #{_lambda_.3} parent=5 // pred_check
        %p362 = pneg %p361
      $region38: #{_lambda_.3} parent=5 // pred_check_branch
        %364 = sbr.rel (%p362) target = $region40
      $region39: #{_lambda_.3} parent=5 // pred_region
        // Predicated region
        $region41: #{_lambda_.3} parent=39 // pred_check
          %p365 = pneg %p69
        $region42: #{_lambda_.3} parent=39 // pred_check_branch
          %367 = sbr.rel (%p365) target = $region44
        $region43: #{_lambda_.3} parent=39 // pred_region
          %s368 = sand.u32 %s59, 1
          %s369 = scalar_lea.sflag [#allocation5], %s368
          %s370 = sand.u32 %s59, 1
          %s371 = smul.addr %s370, 16
          %s372 = scalar_lea.vmem [#allocation4], %s371
          %s373 = sld [smem:[#allocation3 + %s31]]
          %s374 = smul.u32 2, %s33
          %s376 = ssub.s32 256, 256
          %377 = vsyncadd %s369, %s376
          %s378 = smul.addr %s373, 2
          %s379 = sadd.s32 %s374, %s378
          %s380 = smul.addr %s32, 8
          %s381 = sadd.s32 %s379, %s380
          %s382 = smul.addr %s381, 128
          %s383 = scalar_lea.hbm %s1, %s382
          %s384 = sshll.u32 %s372, 4
          %s385 = int_to_ptr.vmem [resolvable:$true] %s384
          %390 = dma.hbm_to_vmem [thread:$0]  %s383, 256, %s385, %s369, 128, 128, 8
        $region44: #{_lambda_.3} parent=39 // pred_fallthru
          _
      $region40: #{_lambda_.3} parent=5 // pred_fallthru
        _
      %p391 = scmp.le.s32.totalorder 1, %s24
      %p392 = scmp.lt.s32.totalorder %s24, 3
      %p393 = pnand %p391, %p392
      %p394 = pneg %p393
      // Predicated region
      $region45: #{_lambda_.3} parent=5 // pred_check
        _
      $region46: #{_lambda_.3} parent=5 // pred_check_branch
        %396 = sbr.rel (%p393) target = $region48
      $region47: #{_lambda_.3} parent=5 // pred_region
        %s397 = ssub.s32 %s24, 1
        %s398 = sand.u32 %s62, 1
        %s399 = scalar_lea.sflag [#allocation5], %s398
        %s400 = sand.u32 %s62, 1
        %s401 = smul.addr %s400, 16
        %s402 = scalar_lea.vmem [#allocation4], %s401
        // Predicated region
        $region49: #{_lambda_.3} parent=47 // pred_check
          %p403 = pneg %p75
        $region50: #{_lambda_.3} parent=47 // pred_check_branch
          %405 = sbr.rel (%p403) target = $region52
        $region51: #{_lambda_.3} parent=47 // pred_region
          %406 = dma.done %s399, 256
        $region52: #{_lambda_.3} parent=47 // pred_fallthru
          _
        // Predicated region
        $region53: #{_lambda_.3} parent=47 // pred_check
          %p407 = pneg %p101
        $region54: #{_lambda_.3} parent=47 // pred_check_branch
          %409 = sbr.rel (%p407) target = $region56
        $region55: #{_lambda_.3} parent=47 // pred_region
          %410 = dma.done [#allocation8], 16
        $region56: #{_lambda_.3} parent=47 // pred_fallthru
          _
        // Predicated region
        $region57: #{_lambda_.3} parent=47 // pred_check
          %p411 = pneg %p127
        $region58: #{_lambda_.3} parent=47 // pred_check_branch
          %413 = sbr.rel (%p411) target = $region60
        $region59: #{_lambda_.3} parent=47 // pred_region
          %414 = dma.done [#allocation8], 16
        $region60: #{_lambda_.3} parent=47 // pred_fallthru
          _
        // Predicated region
        $region61: #{_lambda_.3} parent=47 // pred_check
          %p415 = pneg %p153
        $region62: #{_lambda_.3} parent=47 // pred_check_branch
          %417 = sbr.rel (%p415) target = $region64
        $region63: #{_lambda_.3} parent=47 // pred_region
          %418 = dma.done [#allocation11], 256
        $region64: #{_lambda_.3} parent=47 // pred_fallthru
          _
        // Predicated region
        $region65: #{_lambda_.3} parent=47 // pred_check
          %p419 = pneg %p179
        $region66: #{_lambda_.3} parent=47 // pred_check_branch
          %421 = sbr.rel (%p419) target = $region68
        $region67: #{_lambda_.3} parent=47 // pred_region
          %422 = dma.done [#allocation11], 16
        $region68: #{_lambda_.3} parent=47 // pred_fallthru
          _
        // Predicated region
        $region69: #{_lambda_.3} parent=47 // pred_check
          %p423 = pneg %p205
        $region70: #{_lambda_.3} parent=47 // pred_check_branch
          %425 = sbr.rel (%p423) target = $region72
        $region71: #{_lambda_.3} parent=47 // pred_region
          %426 = dma.done [#allocation14], 2048
        $region72: #{_lambda_.3} parent=47 // pred_fallthru
          _
        // Predicated region
        $region73: #{_lambda_.3} parent=47 // pred_check
          %p427 = pneg %p231
        $region74: #{_lambda_.3} parent=47 // pred_check_branch
          %429 = sbr.rel (%p427) target = $region76
        $region75: #{_lambda_.3} parent=47 // pred_region
          %430 = dma.done [#allocation14], 128
        $region76: #{_lambda_.3} parent=47 // pred_fallthru
          _
        %s431 = sand.u32 %s62, 1
        %s432 = scalar_lea.sflag [#allocation5], %s431
        %s433 = sand.u32 %s62, 1
        %s434 = smul.addr %s433, 16
        %s435 = scalar_lea.vmem [#allocation4], %s434
        %p436 = pneg %p75
        %p437 = pneg %p72
        %p438 = pneg %p101
        %p439 = pneg %p98
        %p440 = pneg %p127
        %p441 = pneg %p124
        %p442 = pneg %p153
        %p443 = pneg %p150
        %p444 = pneg %p179
        %p445 = pneg %p176
        %p446 = pneg %p205
        %p447 = pneg %p202
        %p448 = pneg %p231
        %p449 = pneg %p228
        %p450 = pneg %p261
        %p451 = pneg %p258
        %s452 = sand.u32 %s248, 1
        %s453 = scalar_lea.sflag [#allocation6], %s452
        %s454 = sand.u32 %s248, 1
        %s455 = smul.addr %s454, 64
        %s456 = scalar_lea.vmem [#allocation16], %s455
        %s457 = sld [smem:[#allocation3 + %s34]]
        %s458 = smul.u32 2, %s36
        %s459 = smul.u32 2, %s36
        %v461 = vld [vmem:[%s402] sm:$0xff]
        %v462 = vld [vmem:[%s402 + $0x8] sm:$0xff]
        %vm463 = vcmask 261120
        %v464 = vsel %vm463, %v461, 0.0
        %465 = vadd.xlane.f32.xlu0 %v464
        %v466 = vpop.xlane.xlu0 %465
        %v467 = vsel %vm463, %v462, 0.0
        %468 = vadd.xlane.f32.xlu0 %v467
        %v469 = vpop.xlane.xlu0 %468
        %v470 = vrcp.pop 32.0
        %v471 = vmul.f32 %v466, %v470
        %v472 = vmul.f32 %v469, %v470
        %v473 = vsub.f32 %v461, %v471
        %v474 = vsub.f32 %v462, %v472
        %v475 = vmul.f32 %v473, %v473
        %v476 = vmul.f32 %v474, %v474
        %v477 = vsel %vm463, %v475, 0.0
        %478 = vadd.xlane.f32.xlu0 %v477
        %v479 = vpop.xlane.xlu0 %478
        %v480 = vsel %vm463, %v476, 0.0
        %481 = vadd.xlane.f32.xlu0 %v480
        %v482 = vpop.xlane.xlu0 %481
        %v483 = vmul.f32 %v479, %v470
        %v484 = vmul.f32 %v482, %v470
        %v485 = vadd.f32 %v483, 1e-05
        %v486 = vadd.f32 %v484, 1e-05
        %v487 = vrsqrt.pop %v485
        %v488 = vrsqrt.pop %v486
        %v489 = vmul.f32 %v473, %v487
        %v490 = vmul.f32 %v474, %v488
        %v491 = vld [vmem:[#allocation7] sm:$0x1]
        %v493 = vlaneseq
        %v494 = vshrl.u32 %v493, 7
        %v495 = vsub.s32 0, %v494
        %v496 = vrot.slane %v491, %v495
        %v498 = vmul.f32 %v489, %v496
        %v499 = vmul.f32 %v490, %v496
        %v500 = vld [vmem:[#allocation9] sm:$0x1]
        %v502 = vlaneseq
        %v503 = vshrl.u32 %v502, 7
        %v504 = vsub.s32 0, %v503
        %v505 = vrot.slane %v500, %v504
        %v507 = vadd.f32 %v498, %v505
        %v508 = vadd.f32 %v499, %v505
        %v509 = vpack.c.bf16 %v508, %v507
        %v510 = vld [vmem:[#allocation10] sm:$0xf]
        %v511 = vld [vmem:[#allocation10 + $0x4] sm:$0xf]
        %v512 = vld [vmem:[#allocation10 + $0x8] sm:$0xf]
        %v513 = vld [vmem:[#allocation10 + $0xc] sm:$0xf]
        %v514 = vld [vmem:[#allocation12] sm:$0x1]
        %v516 = vlaneseq
        %v517 = vshrl.u32 %v516, 7
        %v518 = vsub.s32 0, %v517
        %v519 = vrot.slane %v514, %v518
        %v525 = vunpack.c.l.b16 %v510
        %v526 = vunpack.c.l.b16 %v511
        %v527 = vunpack.c.l.b16 %v512
        %v528 = vunpack.c.l.b16 %v513
        %v529 = vpack.c.b16 %v526, %v525
        %v530 = vpack.c.b16 %v528, %v527
        %v534 = vsel %vm463, %v509, 0
        %536 = vmatprep.subr.bf16.mxu0 0
        %537 = vmatpush1.bf16.msra.mxu0 %v529
        %538 = vmatprep.subr.bf16.mxu0 0
        %539 = vmatpush1.bf16.msra.mxu0 %v530
        %540 = vmatprep.subr.bf16.mxu0 0
        %541 = vmatpush1.bf16.msra.mxu0 0
        %542 = vmatprep.subr.bf16.mxu0 0
        %543 = vmatpush1.bf16.msra.mxu0 0
        %544 = vmatprep.subr.bf16.mxu0 0
        %545 = vmatpush1.bf16.msra.mxu0 0
        %546 = vmatprep.subr.bf16.mxu0 0
        %547 = vmatpush1.bf16.msra.mxu0 0
        %548 = vmatprep.subr.bf16.mxu0 0
        %549 = vmatpush1.bf16.msra.mxu0 0
        %550 = vmatprep.subr.bf16.mxu0 0
        %551 = vmatpush1.bf16.msra.mxu0 0
        %552 = vmatprep.subr.bf16.mxu0 0
        %553 = vmatpush1.bf16.msra.mxu0 0
        %554 = vmatprep.subr.bf16.mxu0 0
        %555 = vmatpush1.bf16.msra.mxu0 0
        %556 = vmatprep.subr.bf16.mxu0 0
        %557 = vmatpush1.bf16.msra.mxu0 0
        %558 = vmatprep.subr.bf16.mxu0 0
        %559 = vmatpush1.bf16.msra.mxu0 0
        %560 = vmatprep.subr.bf16.mxu0 0
        %561 = vmatpush1.bf16.msra.mxu0 0
        %562 = vmatprep.subr.bf16.mxu0 0
        %563 = vmatpush1.bf16.msra.mxu0 0
        %564 = vmatprep.subr.bf16.mxu0 0
        %565 = vmatpush1.bf16.msra.mxu0 0
        %566 = vmatprep.subr.bf16.mxu0 0
        %567 = vmatpush1.bf16.msra.mxu0 0
        %568 = vmatprep.mubr.bf16.mxu0 0
        %569 = vmatmul.mubr.bf16.gmra.mrb[0].mxu0 %v534
        %v570 = vpop.f32.mrb[0].mxu0
        %v571 = vadd.f32 %v519, %v570
        %v572 = vpop.f32.mrb[0].mxu0
        %v573 = vpop.f32.mrb[0].mxu0
        %v574 = vadd.f32 %v519, %v573
        %v575 = vpop.f32.mrb[0].mxu0
        %576 = vdwg.mxu0
        %v577 = vtanh.pop %v571
        %v578 = vtanh.pop %v574
        %v579 = vpack.c.bf16 %v578, %v577
        %v580 = vld [vmem:[#allocation13] sm:$0xff]
        %v581 = vld [vmem:[#allocation13 + $0x8] sm:$0xff]
        %v582 = vld [vmem:[#allocation13 + $0x10] sm:$0xff]
        %v583 = vld [vmem:[#allocation13 + $0x18] sm:$0xff]
        %v584 = vld [vmem:[#allocation13 + $0x20] sm:$0xff]
        %v585 = vld [vmem:[#allocation13 + $0x28] sm:$0xff]
        %v586 = vld [vmem:[#allocation13 + $0x30] sm:$0xff]
        %v587 = vld [vmem:[#allocation13 + $0x38] sm:$0xff]
        %v588 = vld [vmem:[#allocation13 + $0x40] sm:$0xff]
        %v589 = vld [vmem:[#allocation13 + $0x48] sm:$0xff]
        %v590 = vld [vmem:[#allocation13 + $0x50] sm:$0xff]
        %v591 = vld [vmem:[#allocation13 + $0x58] sm:$0xff]
        %v592 = vld [vmem:[#allocation13 + $0x60] sm:$0xff]
        %v593 = vld [vmem:[#allocation13 + $0x68] sm:$0xff]
        %v594 = vld [vmem:[#allocation13 + $0x70] sm:$0xff]
        %v595 = vld [vmem:[#allocation13 + $0x78] sm:$0xff]
        %v596 = vld [vmem:[#allocation15] sm:$0xff]
        %v598 = vlaneseq
        %v599 = vshrl.u32 %v598, 7
        %v600 = vsub.s32 0, %v599
        %v601 = vrot.slane %v596, %v600
        %v602 = vlaneseq
        %v603 = vshrl.u32 %v602, 7
        %v604 = vsub.s32 1, %v603
        %v605 = vrot.slane %v596, %v604
        %v606 = vlaneseq
        %v607 = vshrl.u32 %v606, 7
        %v608 = vsub.s32 2, %v607
        %v609 = vrot.slane %v596, %v608
        %v610 = vlaneseq
        %v611 = vshrl.u32 %v610, 7
        %v612 = vsub.s32 3, %v611
        %v613 = vrot.slane %v596, %v612
        %v614 = vlaneseq
        %v615 = vshrl.u32 %v614, 7
        %v616 = vsub.s32 4, %v615
        %v617 = vrot.slane %v596, %v616
        %v618 = vlaneseq
        %v619 = vshrl.u32 %v618, 7
        %v620 = vsub.s32 5, %v619
        %v621 = vrot.slane %v596, %v620
        %v622 = vlaneseq
        %v623 = vshrl.u32 %v622, 7
        %v624 = vsub.s32 6, %v623
        %v625 = vrot.slane %v596, %v624
        %v626 = vlaneseq
        %v627 = vshrl.u32 %v626, 7
        %v628 = vsub.s32 7, %v627
        %v629 = vrot.slane %v596, %v628
        %v654 = vunpack.c.l.b16 %v580
        %v655 = vunpack.c.h.b16 %v580
        %v656 = vunpack.c.l.b16 %v581
        %v657 = vunpack.c.h.b16 %v581
        %v658 = vunpack.c.l.b16 %v582
        %v659 = vunpack.c.h.b16 %v582
        %v660 = vunpack.c.l.b16 %v583
        %v661 = vunpack.c.h.b16 %v583
        %v662 = vunpack.c.l.b16 %v584
        %v663 = vunpack.c.h.b16 %v584
        %v664 = vunpack.c.l.b16 %v585
        %v665 = vunpack.c.h.b16 %v585
        %v666 = vunpack.c.l.b16 %v586
        %v667 = vunpack.c.h.b16 %v586
        %v668 = vunpack.c.l.b16 %v587
        %v669 = vunpack.c.h.b16 %v587
        %v670 = vunpack.c.l.b16 %v588
        %v671 = vunpack.c.h.b16 %v588
        %v672 = vunpack.c.l.b16 %v589
        %v673 = vunpack.c.h.b16 %v589
        %v674 = vunpack.c.l.b16 %v590
        %v675 = vunpack.c.h.b16 %v590
        %v676 = vunpack.c.l.b16 %v591
        %v677 = vunpack.c.h.b16 %v591
        %v678 = vunpack.c.l.b16 %v592
        %v679 = vunpack.c.h.b16 %v592
        %v680 = vunpack.c.l.b16 %v593
        %v681 = vunpack.c.h.b16 %v593
        %v682 = vunpack.c.l.b16 %v594
        %v683 = vunpack.c.h.b16 %v594
        %v684 = vunpack.c.l.b16 %v595
        %v685 = vunpack.c.h.b16 %v595
        %v686 = vpack.c.b16 %v662, %v654
        %v687 = vpack.c.b16 %v663, %v655
        %v688 = vpack.c.b16 %v664, %v656
        %v689 = vpack.c.b16 %v665, %v657
        %v690 = vpack.c.b16 %v666, %v658
        %v691 = vpack.c.b16 %v667, %v659
        %v692 = vpack.c.b16 %v668, %v660
        %v693 = vpack.c.b16 %v669, %v661
        %v694 = vpack.c.b16 %v678, %v670
        %v695 = vpack.c.b16 %v679, %v671
        %v696 = vpack.c.b16 %v680, %v672
        %v697 = vpack.c.b16 %v681, %v673
        %v698 = vpack.c.b16 %v682, %v674
        %v699 = vpack.c.b16 %v683, %v675
        %v700 = vpack.c.b16 %v684, %v676
        %v701 = vpack.c.b16 %v685, %v677
        %v719 = vsel %vm463, %v579, 0
        %721 = vmatprep.subr.bf16.mxu0 %v687
        %722 = vmatpush1.bf16.msra.mxu0 %v686
        %723 = vmatprep.subr.bf16.mxu0 %v695
        %724 = vmatpush1.bf16.msra.mxu0 %v694
        %725 = vmatprep.subr.bf16.mxu0 0
        %726 = vmatpush1.bf16.msra.mxu0 0
        %727 = vmatprep.subr.bf16.mxu0 0
        %728 = vmatpush1.bf16.msra.mxu0 0
        %729 = vmatprep.subr.bf16.mxu0 0
        %730 = vmatpush1.bf16.msra.mxu0 0
        %731 = vmatprep.subr.bf16.mxu0 0
        %732 = vmatpush1.bf16.msra.mxu0 0
        %733 = vmatprep.subr.bf16.mxu0 0
        %734 = vmatpush1.bf16.msra.mxu0 0
        %735 = vmatprep.subr.bf16.mxu0 0
        %736 = vmatpush1.bf16.msra.mxu0 0
        %737 = vmatprep.subr.bf16.mxu0 0
        %738 = vmatpush1.bf16.msra.mxu0 0
        %739 = vmatprep.subr.bf16.mxu0 0
        %740 = vmatpush1.bf16.msra.mxu0 0
        %741 = vmatprep.subr.bf16.mxu0 0
        %742 = vmatpush1.bf16.msra.mxu0 0
        %743 = vmatprep.subr.bf16.mxu0 0
        %744 = vmatpush1.bf16.msra.mxu0 0
        %745 = vmatprep.subr.bf16.mxu0 0
        %746 = vmatpush1.bf16.msra.mxu0 0
        %747 = vmatprep.subr.bf16.mxu0 0
        %748 = vmatpush1.bf16.msra.mxu0 0
        %749 = vmatprep.subr.bf16.mxu0 0
        %750 = vmatpush1.bf16.msra.mxu0 0
        %751 = vmatprep.subr.bf16.mxu0 0
        %752 = vmatpush1.bf16.msra.mxu0 0
        %753 = vmatprep.mubr.bf16.mxu0 0
        %754 = vmatmul.mubr.bf16.gmra.mrb[0].mxu0 %v719
        %v755 = vpop.f32.mrb[0].mxu0
        %v756 = vadd.f32 %v601, %v755
        %v757 = vpop.f32.mrb[0].mxu0
        %v758 = vadd.f32 %v605, %v757
        %v759 = vpop.f32.mrb[0].mxu0
        %v760 = vadd.f32 %v601, %v759
        %v761 = vpop.f32.mrb[0].mxu0
        %v762 = vadd.f32 %v605, %v761
        %763 = vdwg.mxu0
        %764 = vmatprep.subr.bf16.mxu0 %v689
        %765 = vmatpush1.bf16.msra.mxu0 %v688
        %766 = vmatprep.subr.bf16.mxu0 %v697
        %767 = vmatpush1.bf16.msra.mxu0 %v696
        %768 = vmatprep.subr.bf16.mxu0 0
        %769 = vmatpush1.bf16.msra.mxu0 0
        %770 = vmatprep.subr.bf16.mxu0 0
        %771 = vmatpush1.bf16.msra.mxu0 0
        %772 = vmatprep.subr.bf16.mxu0 0
        %773 = vmatpush1.bf16.msra.mxu0 0
        %774 = vmatprep.subr.bf16.mxu0 0
        %775 = vmatpush1.bf16.msra.mxu0 0
        %776 = vmatprep.subr.bf16.mxu0 0
        %777 = vmatpush1.bf16.msra.mxu0 0
        %778 = vmatprep.subr.bf16.mxu0 0
        %779 = vmatpush1.bf16.msra.mxu0 0
        %780 = vmatprep.subr.bf16.mxu0 0
        %781 = vmatpush1.bf16.msra.mxu0 0
        %782 = vmatprep.subr.bf16.mxu0 0
        %783 = vmatpush1.bf16.msra.mxu0 0
        %784 = vmatprep.subr.bf16.mxu0 0
        %785 = vmatpush1.bf16.msra.mxu0 0
        %786 = vmatprep.subr.bf16.mxu0 0
        %787 = vmatpush1.bf16.msra.mxu0 0
        %788 = vmatprep.subr.bf16.mxu0 0
        %789 = vmatpush1.bf16.msra.mxu0 0
        %790 = vmatprep.subr.bf16.mxu0 0
        %791 = vmatpush1.bf16.msra.mxu0 0
        %792 = vmatprep.subr.bf16.mxu0 0
        %793 = vmatpush1.bf16.msra.mxu0 0
        %794 = vmatprep.subr.bf16.mxu0 0
        %795 = vmatpush1.bf16.msra.mxu0 0
        %796 = vmatprep.mubr.bf16.mxu0 0
        %797 = vmatmul.mubr.bf16.gmra.mrb[0].mxu0 %v719
        %v798 = vpop.f32.mrb[0].mxu0
        %v799 = vadd.f32 %v609, %v798
        %v800 = vpop.f32.mrb[0].mxu0
        %v801 = vadd.f32 %v613, %v800
        %v802 = vpop.f32.mrb[0].mxu0
        %v803 = vadd.f32 %v609, %v802
        %v804 = vpop.f32.mrb[0].mxu0
        %v805 = vadd.f32 %v613, %v804
        %806 = vdwg.mxu0
        %807 = vmatprep.subr.bf16.mxu0 %v691
        %808 = vmatpush1.bf16.msra.mxu0 %v690
        %809 = vmatprep.subr.bf16.mxu0 %v699
        %810 = vmatpush1.bf16.msra.mxu0 %v698
        %811 = vmatprep.subr.bf16.mxu0 0
        %812 = vmatpush1.bf16.msra.mxu0 0
        %813 = vmatprep.subr.bf16.mxu0 0
        %814 = vmatpush1.bf16.msra.mxu0 0
        %815 = vmatprep.subr.bf16.mxu0 0
        %816 = vmatpush1.bf16.msra.mxu0 0
        %817 = vmatprep.subr.bf16.mxu0 0
        %818 = vmatpush1.bf16.msra.mxu0 0
        %819 = vmatprep.subr.bf16.mxu0 0
        %820 = vmatpush1.bf16.msra.mxu0 0
        %821 = vmatprep.subr.bf16.mxu0 0
        %822 = vmatpush1.bf16.msra.mxu0 0
        %823 = vmatprep.subr.bf16.mxu0 0
        %824 = vmatpush1.bf16.msra.mxu0 0
        %825 = vmatprep.subr.bf16.mxu0 0
        %826 = vmatpush1.bf16.msra.mxu0 0
        %827 = vmatprep.subr.bf16.mxu0 0
        %828 = vmatpush1.bf16.msra.mxu0 0
        %829 = vmatprep.subr.bf16.mxu0 0
        %830 = vmatpush1.bf16.msra.mxu0 0
        %831 = vmatprep.subr.bf16.mxu0 0
        %832 = vmatpush1.bf16.msra.mxu0 0
        %833 = vmatprep.subr.bf16.mxu0 0
        %834 = vmatpush1.bf16.msra.mxu0 0
        %835 = vmatprep.subr.bf16.mxu0 0
        %836 = vmatpush1.bf16.msra.mxu0 0
        %837 = vmatprep.subr.bf16.mxu0 0
        %838 = vmatpush1.bf16.msra.mxu0 0
        %839 = vmatprep.mubr.bf16.mxu0 0
        %840 = vmatmul.mubr.bf16.gmra.mrb[0].mxu0 %v719
        %v841 = vpop.f32.mrb[0].mxu0
        %v842 = vadd.f32 %v617, %v841
        %v843 = vpop.f32.mrb[0].mxu0
        %v844 = vadd.f32 %v621, %v843
        %v845 = vpop.f32.mrb[0].mxu0
        %v846 = vadd.f32 %v617, %v845
        %v847 = vpop.f32.mrb[0].mxu0
        %v848 = vadd.f32 %v621, %v847
        %849 = vdwg.mxu0
        %850 = vmatprep.subr.bf16.mxu0 %v693
        %851 = vmatpush1.bf16.msra.mxu0 %v692
        %852 = vmatprep.subr.bf16.mxu0 %v701
        %853 = vmatpush1.bf16.msra.mxu0 %v700
        %854 = vmatprep.subr.bf16.mxu0 0
        %855 = vmatpush1.bf16.msra.mxu0 0
        %856 = vmatprep.subr.bf16.mxu0 0
        %857 = vmatpush1.bf16.msra.mxu0 0
        %858 = vmatprep.subr.bf16.mxu0 0
        %859 = vmatpush1.bf16.msra.mxu0 0
        %860 = vmatprep.subr.bf16.mxu0 0
        %861 = vmatpush1.bf16.msra.mxu0 0
        %862 = vmatprep.subr.bf16.mxu0 0
        %863 = vmatpush1.bf16.msra.mxu0 0
        %864 = vmatprep.subr.bf16.mxu0 0
        %865 = vmatpush1.bf16.msra.mxu0 0
        %866 = vmatprep.subr.bf16.mxu0 0
        %867 = vmatpush1.bf16.msra.mxu0 0
        %868 = vmatprep.subr.bf16.mxu0 0
        %869 = vmatpush1.bf16.msra.mxu0 0
        %870 = vmatprep.subr.bf16.mxu0 0
        %871 = vmatpush1.bf16.msra.mxu0 0
        %872 = vmatprep.subr.bf16.mxu0 0
        %873 = vmatpush1.bf16.msra.mxu0 0
        %874 = vmatprep.subr.bf16.mxu0 0
        %875 = vmatpush1.bf16.msra.mxu0 0
        %876 = vmatprep.subr.bf16.mxu0 0
        %877 = vmatpush1.bf16.msra.mxu0 0
        %878 = vmatprep.subr.bf16.mxu0 0
        %879 = vmatpush1.bf16.msra.mxu0 0
        %880 = vmatprep.subr.bf16.mxu0 0
        %881 = vmatpush1.bf16.msra.mxu0 0
        %882 = vmatprep.mubr.bf16.mxu0 0
        %883 = vmatmul.mubr.bf16.gmra.mrb[0].mxu0 %v719
        %v884 = vpop.f32.mrb[0].mxu0
        %v885 = vadd.f32 %v625, %v884
        %v886 = vpop.f32.mrb[0].mxu0
        %v887 = vadd.f32 %v629, %v886
        %v888 = vpop.f32.mrb[0].mxu0
        %v889 = vadd.f32 %v625, %v888
        %v890 = vpop.f32.mrb[0].mxu0
        %v891 = vadd.f32 %v629, %v890
        %892 = vdwg.mxu0
        %v893 = vxor.u32 %v842, 2147483648
        %v894 = vxor.u32 %v844, 2147483648
        %v895 = vxor.u32 %v885, 2147483648
        %v896 = vxor.u32 %v887, 2147483648
        %v897 = vxor.u32 %v846, 2147483648
        %v898 = vxor.u32 %v848, 2147483648
        %v899 = vxor.u32 %v889, 2147483648
        %v900 = vxor.u32 %v891, 2147483648
        %v901 = vmul.f32 %v893, 1.442695
        %v902 = vpow.pop %v901
        %v903 = vmul.f32 %v894, 1.442695
        %v904 = vpow.pop %v903
        %v905 = vmul.f32 %v895, 1.442695
        %v906 = vpow.pop %v905
        %v907 = vmul.f32 %v896, 1.442695
        %v908 = vpow.pop %v907
        %v909 = vmul.f32 %v897, 1.442695
        %v910 = vpow.pop %v909
        %v911 = vmul.f32 %v898, 1.442695
        %v912 = vpow.pop %v911
        %v913 = vmul.f32 %v899, 1.442695
        %v914 = vpow.pop %v913
        %v915 = vmul.f32 %v900, 1.442695
        %v916 = vpow.pop %v915
        %v917 = vadd.f32 %v902, 1.0
        %v918 = vadd.f32 %v904, 1.0
        %v919 = vadd.f32 %v906, 1.0
        %v920 = vadd.f32 %v908, 1.0
        %v921 = vadd.f32 %v910, 1.0
        %v922 = vadd.f32 %v912, 1.0
        %v923 = vadd.f32 %v914, 1.0
        %v924 = vadd.f32 %v916, 1.0
        %v925 = vrcp.pop %v917
        %v926 = vmul.f32 1.0, %v925
        %v927 = vrcp.pop %v918
        %v928 = vmul.f32 1.0, %v927
        %v929 = vrcp.pop %v919
        %v930 = vmul.f32 1.0, %v929
        %v931 = vrcp.pop %v920
        %v932 = vmul.f32 1.0, %v931
        %v933 = vrcp.pop %v921
        %v934 = vmul.f32 1.0, %v933
        %v935 = vrcp.pop %v922
        %v936 = vmul.f32 1.0, %v935
        %v937 = vrcp.pop %v923
        %v938 = vmul.f32 1.0, %v937
        %v939 = vrcp.pop %v924
        %v940 = vmul.f32 1.0, %v939
        %v941 = vmul.f32 %v756, %v926
        %v942 = vmul.f32 %v758, %v928
        %v943 = vmul.f32 %v799, %v930
        %v944 = vmul.f32 %v801, %v932
        %v945 = vmul.f32 %v760, %v934
        %v946 = vmul.f32 %v762, %v936
        %v947 = vmul.f32 %v803, %v938
        %v948 = vmul.f32 %v805, %v940
        %949 = vst [vmem:[%s456] sm:$0xff] %v941
        %950 = vst [vmem:[%s456 + $0x8] sm:$0xff] %v942
        %951 = vst [vmem:[%s456 + $0x10] sm:$0xff] %v943
        %952 = vst [vmem:[%s456 + $0x18] sm:$0xff] %v944
        %953 = vst [vmem:[%s456 + $0x20] sm:$0xff] %v945
        %954 = vst [vmem:[%s456 + $0x28] sm:$0xff] %v946
        %955 = vst [vmem:[%s456 + $0x30] sm:$0xff] %v947
        %956 = vst [vmem:[%s456 + $0x38] sm:$0xff] %v948
        %s957 = sand.u32 %s248, 1
        %s958 = scalar_lea.sflag [#allocation6], %s957
        %s959 = sand.u32 %s248, 1
        %s960 = smul.addr %s959, 64
        %s961 = scalar_lea.vmem [#allocation16], %s960
        // Predicated region
        $region77: #{_lambda_.3} parent=47 // pred_check
          %p962 = pneg %p258
        $region78: #{_lambda_.3} parent=47 // pred_check_branch
          %964 = sbr.rel (%p962) target = $region80
        $region79: #{_lambda_.3} parent=47 // pred_region
          %s965 = smul.u32 2, %s36
          %s967 = ssub.s32 1024, 1024
          %968 = vsyncadd %s958, %s967
          %s969 = smul.addr %s965, 4
          %s970 = smul.addr %s35, 8
          %s971 = sadd.s32 %s969, %s970
          %s972 = smul.addr %s34, 16
          %s973 = sadd.s32 %s971, %s972
          %s974 = smul.addr %s973, 128
          %s975 = scalar_lea.hbm %s8, %s974
          %s976 = sshll.u32 %s961, 4
          %s977 = int_to_ptr.vmem [resolvable:$true] %s976
          %982 = dma.vmem_to_hbm [thread:$0]  %s977, 1024, %s975, %s958, 512, 512, 32
        $region80: #{_lambda_.3} parent=47 // pred_fallthru
          _
      $region48: #{_lambda_.3} parent=5 // pred_fallthru
        _
      %p983 = scmp.le.s32.totalorder 2, %s24
      // Predicated region
      $region81: #{_lambda_.3} parent=5 // pred_check
        %p984 = pneg %p983
      $region82: #{_lambda_.3} parent=5 // pred_check_branch
        %986 = sbr.rel (%p984) target = $region84
      $region83: #{_lambda_.3} parent=5 // pred_region
        %s987 = ssub.s32 %s24, 2
        // Predicated region
        $region85: #{_lambda_.3} parent=83 // pred_check
          %p988 = pneg %p264
        $region86: #{_lambda_.3} parent=83 // pred_check_branch
          %990 = sbr.rel (%p988) target = $region88
        $region87: #{_lambda_.3} parent=83 // pred_region
          %s991 = sand.u32 %s249, 1
          %s992 = scalar_lea.sflag [#allocation6], %s991
          %s993 = sand.u32 %s249, 1
          %s994 = smul.addr %s993, 64
          %s995 = scalar_lea.vmem [#allocation16], %s994
          %996 = dma.done %s992, 1024
        $region88: #{_lambda_.3} parent=83 // pred_fallthru
          _
      $region84: #{_lambda_.3} parent=5 // pred_fallthru
        _
    $region6: #{_lambda_.3} parent=1 // loop_footer
      %s28 = sadd.s32 1, %s24
    $region7: #{_lambda_.3} parent=1 // loop_footer_branch
      %23 = sbr.rel target = $region3
    $region8: #{_lambda_.3} parent=1 // loop_exit
      _
    %997 = vsyncpa [#allocation5], 1
    %s998 = scalar_lea.sflag [#allocation5], 1
    %999 = vsyncpa %s998, 1
    %1000 = vsyncpa [#allocation8], 1
    %1001 = vsyncpa [#allocation11], 1
    %1002 = vsyncpa [#allocation14], 1
    %1003 = vsyncpa [#allocation6], 1
    %s1004 = scalar_lea.sflag [#allocation6], 1
    %1005 = vsyncpa %s1004, 1

</llo_original>
